<compile_context>
chip_gen: v7x
topology: tpu7x:2x2x1
jax: 0.10.0
libtpu: 0.0.40
codegen_flags: <defaults>
</compile_context>

<pallas_src>
from functools import partial

import jax
import jax.numpy as jnp
from jax.experimental import pallas as pl
from jax.experimental.pallas import tpu as pltpu


HID_N = 64
FEAT_CH = 16 + 3            # 19
N_VIEWS = 3
D_IN = 8 + FEAT_CH * N_VIEWS  # 65 (contraction dim of the original first Linear)


def _softplus(x):
    # matches torch.nn.Softplus(beta=1, threshold=20)
    return jnp.where(x > 20.0, x, jnp.log1p(jnp.exp(jnp.minimum(x, 20.0))))


def mvsnerf_kernel(vox_ref, img_ref, wv_ref, wi_ref, b0_ref,
                   wc1_ref, bc1_ref, wh_ref, bh_ref, out_ref):
    # lr0: fused Linear(8 + feat_ch*N_views -> hid) + ReLU.
    # The dir channels of img_ref hit zero rows of wi_ref, reproducing the
    # `[..., :-4]` slice + concat of the PyTorch forward without any wrapper
    # materialization.
    h = jnp.dot(vox_ref[...], wv_ref[...], preferred_element_type=jnp.float32)
    h = h + jnp.dot(img_ref[...], wi_ref[...], preferred_element_type=jnp.float32)
    h = jnp.maximum(h + b0_ref[...], 0.0)                    # (TM, hid) f32
    hb = h.astype(jnp.bfloat16)

    # color hidden layer: Linear(hid, hid) + ReLU
    c = jnp.dot(hb, wc1_ref[...], preferred_element_type=jnp.float32) + bc1_ref[...]
    c = jnp.maximum(c, 0.0)                                   # (TM, hid) f32

    # Merged head: [color_pre | sigma_pre] = [c | h] @ blockdiag(wc2, ws) + [bc2 | bs]
    hc = jnp.concatenate([c.astype(jnp.bfloat16), hb], axis=-1)   # (TM, 2*hid)
    pre = jnp.dot(hc, wh_ref[...], preferred_element_type=jnp.float32) + bh_ref[...]

    # lanes 0..2 -> sigmoid (color), lane 3 -> softplus (sigma)
    lane = jax.lax.broadcasted_iota(jnp.int32, pre.shape, 1)
    out = jnp.where(lane < 3, jax.nn.sigmoid(pre), _softplus(pre))
    out_ref[...] = out.astype(out_ref.dtype)


@partial(jax.jit, static_argnames=("tile_m",))
def mvsnerf_pallas(vox_feat, img_feat_rgb_dir, params, tile_m=512):
    """vox_feat: (B, Np, 8), img_feat_rgb_dir: (B, Np, N_views, feat_ch+4)."""
    B, N_points, N_views, view_ch = img_feat_rgb_dir.shape
    feat_ch = view_ch - 4
    hid = HID_N
    k_img = N_views * view_ch
    M = B * N_points

    # Free reshapes of the raw inputs (no concat / no extra HBM traffic),
    # bf16 operands for the MXU (f32 accumulation inside the kernel).
    vox2 = vox_feat.reshape(M, 8).astype(jnp.bfloat16)
    img2 = img_feat_rgb_dir.reshape(M, k_img).astype(jnp.bfloat16)

    # Pad rows up to a multiple of tile_m (padded rows are discarded at the end).
    num_blocks = pl.cdiv(M, tile_m)
    m_pad = num_blocks * tile_m
    if m_pad != M:
        vox2 = jnp.pad(vox2, ((0, m_pad - M), (0, 0)))
        img2 = jnp.pad(img2, ((0, m_pad - M), (0, 0)))

    # ---- weight preparation (tiny; weights stay resident in VMEM) ----------
    w0, b0, ws, bs, wc1, bc1, wc2, bc2 = params
    assert w0.shape == (8 + feat_ch * N_views, hid)

    # Split/scatter the first Linear: rows 0..7 act on vox, and for view v the
    # rows 8+v*feat_ch .. 8+(v+1)*feat_ch land at lanes v*view_ch .. +feat_ch
    # of the raw per-view slab; the 4 dir rows per view stay zero.
    w_vox = w0[:8]
    w_img = jnp.zeros((k_img, hid), w0.dtype)
    for v in range(N_views):
        w_img = w_img.at[v * view_ch: v * view_ch + feat_ch].set(
            w0[8 + v * feat_ch: 8 + (v + 1) * feat_ch])

    # Merged head weight: [c | h] @ [[wc2, 0], [0, ws]] -> [color_pre, sigma_pre]
    w_head = jnp.zeros((2 * hid, 4), w0.dtype)
    w_head = w_head.at[:hid, :3].set(wc2)
    w_head = w_head.at[hid:, 3:4].set(ws)
    b_head = jnp.concatenate([bc2, bs], axis=-1)              # (1, 4)

    bf = jnp.bfloat16
    wv_b, wi_b, wc1_b, wh_b = (w_vox.astype(bf), w_img.astype(bf),
                               wc1.astype(bf), w_head.astype(bf))
    b0_f, bc1_f, bh_f = (b0.astype(jnp.float32), bc1.astype(jnp.float32),
                         b_head.astype(jnp.float32))

    full = lambda shape: pl.BlockSpec(shape, lambda i: (0, 0))

    out = pl.pallas_call(
        mvsnerf_kernel,
        out_shape=jax.ShapeDtypeStruct((m_pad, 4), jnp.float32),
        grid_spec=pltpu.PrefetchScalarGridSpec(
            num_scalar_prefetch=0,
            grid=(num_blocks,),
            in_specs=[
                pl.BlockSpec((tile_m, 8), lambda i: (i, 0)),      # vox rows
                pl.BlockSpec((tile_m, k_img), lambda i: (i, 0)),  # raw img rows
                full(wv_b.shape), full(wi_b.shape), full(b0_f.shape),
                full(wc1_b.shape), full(bc1_f.shape),
                full(wh_b.shape), full(bh_f.shape),
            ],
            out_specs=pl.BlockSpec((tile_m, 4), lambda i: (i, 0)),
        ),
        compiler_params=pltpu.CompilerParams(
            dimension_semantics=("parallel",)),   # shards blocks across v7x TCs
    )(vox2, img2, wv_b, wi_b, b0_f, wc1_b, bc1_f, wh_b, bh_f)

    return out[:M].reshape(B, N_points, 4)


def init_params(key, hid_n=HID_N, d_in=D_IN):
    """Deterministic kaiming-normal weights, zero biases (matches weights_init)."""
    ks = jax.random.split(key, 4)

    def kaiming(k, fan_in, fan_out):
        std = jnp.sqrt(2.0 / fan_in)
        return jax.random.normal(k, (fan_in, fan_out), jnp.float32) * std

    w0 = kaiming(ks[0], d_in, hid_n)
    b0 = jnp.zeros((1, hid_n), jnp.float32)
    ws = kaiming(ks[1], hid_n, 1)
    bs = jnp.zeros((1, 1), jnp.float32)
    wc1 = kaiming(ks[2], hid_n, hid_n)
    bc1 = jnp.zeros((1, hid_n), jnp.float32)
    wc2 = kaiming(ks[3], hid_n, 3)
    bc2 = jnp.zeros((1, 3), jnp.float32)
    return (w0, b0, ws, bs, wc1, bc1, wc2, bc2)


def mvsnerf_reference(vox_feat, img_feat_rgb_dir, params):
    """Pure-JAX f32 reference mirroring the PyTorch forward."""
    B, Np, Nv, _ = img_feat_rgb_dir.shape
    vox = vox_feat.astype(jnp.float32)
    img = img_feat_rgb_dir.astype(jnp.float32)
    img_feat = jnp.concatenate([img[..., i, :-4] for i in range(Nv)], axis=-1)
    x = jnp.concatenate([vox, img_feat], axis=-1)
    w0, b0, ws, bs, wc1, bc1, wc2, bc2 = params
    h = jnp.maximum(x @ w0 + b0[0], 0.0)
    sigma = _softplus(h @ ws + bs[0])
    c = jnp.maximum(h @ wc1 + bc1[0], 0.0)
    color = jax.nn.sigmoid(c @ wc2 + bc2[0])
    return jnp.concatenate([color, sigma], axis=-1)


if __name__ == "__main__":
    key = jax.random.PRNGKey(0)
    k_vox, k_img, k_par = jax.random.split(key, 3)

    # Small but non-divisible shapes: M = 1000 -> padded to 1024, 4 row tiles.
    B, N_points, N_views = 2, 500, N_VIEWS
    # bf16 "at the source" (the kernel's matmul operand width).
    vox_feat = jax.random.normal(
        k_vox, (B, N_points, 8), jnp.float32).astype(jnp.bfloat16)
    img_feat_rgb_dir = jax.random.normal(
        k_img, (B, N_points, N_views, FEAT_CH + 4), jnp.float32).astype(jnp.bfloat16)

    params = init_params(k_par)

    out = mvsnerf_pallas(vox_feat, img_feat_rgb_dir, params, tile_m=256)
    out = jax.block_until_ready(out)

    ref = mvsnerf_reference(vox_feat, img_feat_rgb_dir, params)
    assert out.shape == (B, N_points, 4)
    assert bool(jnp.all(jnp.isfinite(out)))
    # bf16 matmul operands with f32 accumulation vs. a pure-f32 reference.
    assert jnp.allclose(out, ref, atol=5e-2, rtol=5e-2), "mismatch vs reference"

    print("KERNEL_OK")
</pallas_src>

<mosaic_0001>
module attributes {stable_mosaic.version = 11 : i64} {
  func.func @mvsnerf_kernel(%arg0: i32, %arg1: memref<256x8xbf16, #tpu.memory_space<vmem>>, %arg2: memref<256x69xbf16, #tpu.memory_space<vmem>>, %arg3: memref<8x64xbf16, #tpu.memory_space<vmem>>, %arg4: memref<69x64xbf16, #tpu.memory_space<vmem>>, %arg5: memref<1x64xf32, #tpu.memory_space<vmem>>, %arg6: memref<64x64xbf16, #tpu.memory_space<vmem>>, %arg7: memref<1x64xf32, #tpu.memory_space<vmem>>, %arg8: memref<128x4xbf16, #tpu.memory_space<vmem>>, %arg9: memref<1x4xf32, #tpu.memory_space<vmem>>, %arg10: memref<256x4xf32, #tpu.memory_space<vmem>>) attributes {dimension_semantics = [#tpu.dimension_semantics<parallel>], iteration_bounds = array<i64: 4>, scalar_prefetch = 0 : i64, scratch_operands = 0 : i64, tpu.core_type = #tpu.core_type<tc>, window_params = [{transform_indices = @transform_0, window_bounds = array<i64: 256, 8>}, {transform_indices = @transform_1, window_bounds = array<i64: 256, 69>}, {pipeline_mode = #tpu.pipeline_mode<synchronous>, transform_indices = @transform_2, window_bounds = array<i64: 8, 64>}, {pipeline_mode = #tpu.pipeline_mode<synchronous>, transform_indices = @transform_3, window_bounds = array<i64: 69, 64>}, {pipeline_mode = #tpu.pipeline_mode<synchronous>, transform_indices = @transform_4, window_bounds = array<i64: 1, 64>}, {pipeline_mode = #tpu.pipeline_mode<synchronous>, transform_indices = @transform_5, window_bounds = array<i64: 64, 64>}, {pipeline_mode = #tpu.pipeline_mode<synchronous>, transform_indices = @transform_6, window_bounds = array<i64: 1, 64>}, {pipeline_mode = #tpu.pipeline_mode<synchronous>, transform_indices = @transform_7, window_bounds = array<i64: 128, 4>}, {pipeline_mode = #tpu.pipeline_mode<synchronous>, transform_indices = @transform_8, window_bounds = array<i64: 1, 4>}, {transform_indices = @transform_9, window_bounds = array<i64: 256, 4>}]} {
    %c0 = arith.constant 0 : index
    %c0_0 = arith.constant 0 : index
    %0 = vector.load %arg1[%c0, %c0_0] : memref<256x8xbf16, #tpu.memory_space<vmem>>, vector<256x8xbf16>
    %c0_1 = arith.constant 0 : index
    %c0_2 = arith.constant 0 : index
    %1 = vector.load %arg3[%c0_1, %c0_2] : memref<8x64xbf16, #tpu.memory_space<vmem>>, vector<8x64xbf16>
    %cst = arith.constant dense<0.000000e+00> : vector<256x64xf32>
    %2 = tpu.matmul %0, %1, %cst {dimension_numbers = #tpu.dot_dimension_numbers<[1], [0], [0], [1], [0, 0, 1, 1], [], []>} : vector<256x8xbf16>, vector<8x64xbf16>, vector<256x64xf32> -> vector<256x64xf32>
    %c0_3 = arith.constant 0 : index
    %c0_4 = arith.constant 0 : index
    %3 = vector.load %arg2[%c0_3, %c0_4] : memref<256x69xbf16, #tpu.memory_space<vmem>>, vector<256x69xbf16>
    %c0_5 = arith.constant 0 : index
    %c0_6 = arith.constant 0 : index
    %4 = vector.load %arg4[%c0_5, %c0_6] : memref<69x64xbf16, #tpu.memory_space<vmem>>, vector<69x64xbf16>
    %cst_7 = arith.constant dense<0.000000e+00> : vector<256x64xf32>
    %5 = tpu.matmul %3, %4, %cst_7 {dimension_numbers = #tpu.dot_dimension_numbers<[1], [0], [0], [1], [0, 0, 1, 1], [], []>} : vector<256x69xbf16>, vector<69x64xbf16>, vector<256x64xf32> -> vector<256x64xf32>
    %6 = arith.addf %2, %5 : vector<256x64xf32>
    %c0_8 = arith.constant 0 : index
    %c0_9 = arith.constant 0 : index
    %7 = vector.load %arg5[%c0_8, %c0_9] : memref<1x64xf32, #tpu.memory_space<vmem>>, vector<1x64xf32>
    %8 = vector.broadcast %7 : vector<1x64xf32> to vector<256x64xf32>
    %9 = arith.addf %6, %8 : vector<256x64xf32>
    %cst_10 = arith.constant 0.000000e+00 : f32
    %10 = vector.broadcast %cst_10 : f32 to vector<256x64xf32>
    %11 = arith.maximumf %9, %10 : vector<256x64xf32>
    %12 = arith.truncf %11 : vector<256x64xf32> to vector<256x64xbf16>
    %c0_11 = arith.constant 0 : index
    %c0_12 = arith.constant 0 : index
    %13 = vector.load %arg6[%c0_11, %c0_12] : memref<64x64xbf16, #tpu.memory_space<vmem>>, vector<64x64xbf16>
    %cst_13 = arith.constant dense<0.000000e+00> : vector<256x64xf32>
    %14 = tpu.matmul %12, %13, %cst_13 {dimension_numbers = #tpu.dot_dimension_numbers<[1], [0], [0], [1], [0, 0, 1, 1], [], []>} : vector<256x64xbf16>, vector<64x64xbf16>, vector<256x64xf32> -> vector<256x64xf32>
    %c0_14 = arith.constant 0 : index
    %c0_15 = arith.constant 0 : index
    %15 = vector.load %arg7[%c0_14, %c0_15] : memref<1x64xf32, #tpu.memory_space<vmem>>, vector<1x64xf32>
    %16 = vector.broadcast %15 : vector<1x64xf32> to vector<256x64xf32>
    %17 = arith.addf %14, %16 : vector<256x64xf32>
    %cst_16 = arith.constant 0.000000e+00 : f32
    %18 = vector.broadcast %cst_16 : f32 to vector<256x64xf32>
    %19 = arith.maximumf %17, %18 : vector<256x64xf32>
    %20 = arith.truncf %19 : vector<256x64xf32> to vector<256x64xbf16>
    %21 = tpu.concatenate %20, %12 in 1 : vector<256x64xbf16>, vector<256x64xbf16> -> vector<256x128xbf16>
    %c0_17 = arith.constant 0 : index
    %c0_18 = arith.constant 0 : index
    %22 = vector.load %arg8[%c0_17, %c0_18] : memref<128x4xbf16, #tpu.memory_space<vmem>>, vector<128x4xbf16>
    %cst_19 = arith.constant dense<0.000000e+00> : vector<256x4xf32>
    %23 = tpu.matmul %21, %22, %cst_19 {dimension_numbers = #tpu.dot_dimension_numbers<[1], [0], [0], [1], [0, 0, 1, 1], [], []>} : vector<256x128xbf16>, vector<128x4xbf16>, vector<256x4xf32> -> vector<256x4xf32>
    %c0_20 = arith.constant 0 : index
    %c0_21 = arith.constant 0 : index
    %24 = vector.load %arg9[%c0_20, %c0_21] : memref<1x4xf32, #tpu.memory_space<vmem>>, vector<1x4xf32>
    %25 = vector.broadcast %24 : vector<1x4xf32> to vector<256x4xf32>
    %26 = arith.addf %23, %25 : vector<256x4xf32>
    %27 = tpu.iota {dimensions = array<i32: 1>} : vector<256x4xi32>
    %c3_i32 = arith.constant 3 : i32
    %28 = vector.broadcast %c3_i32 : i32 to vector<256x4xi32>
    %29 = arith.cmpi slt, %27, %28 : vector<256x4xi32>
    %30 = arith.negf %26 : vector<256x4xf32>
    %31 = math.exp %30 : vector<256x4xf32>
    %cst_22 = arith.constant 1.000000e+00 : f32
    %32 = vector.broadcast %cst_22 : f32 to vector<256x4xf32>
    %33 = arith.addf %32, %31 : vector<256x4xf32>
    %34 = arith.divf %32, %33 : vector<256x4xf32>
    %cst_23 = arith.constant 2.000000e+01 : f32
    %35 = vector.broadcast %cst_23 : f32 to vector<256x4xf32>
    %36 = arith.cmpf ogt, %26, %35 : vector<256x4xf32>
    %cst_24 = arith.constant 2.000000e+01 : f32
    %37 = vector.broadcast %cst_24 : f32 to vector<256x4xf32>
    %38 = arith.minimumf %26, %37 : vector<256x4xf32>
    %39 = math.exp %38 : vector<256x4xf32>
    %40 = math.log1p %39 : vector<256x4xf32>
    %41 = arith.select %36, %26, %40 : vector<256x4xi1>, vector<256x4xf32>
    %42 = arith.select %29, %34, %41 : vector<256x4xi1>, vector<256x4xf32>
    %c0_25 = arith.constant 0 : index
    %c0_26 = arith.constant 0 : index
    %43 = vector.load %arg10[%c0_25, %c0_26] : memref<256x4xf32, #tpu.memory_space<vmem>>, vector<256x4xf32>
    tpu.vector_store %arg10[%c0_25, %c0_26], %42 {strides = array<i32>} : memref<256x4xf32, #tpu.memory_space<vmem>>, vector<256x4xf32>,
    return
  }
  func.func @transform_0(%arg0: i32) -> (i32, i32) {
    %c0_i32 = arith.constant 0 : i32
    %c0_i32_0 = arith.constant 0 : i32
    return %arg0, %c0_i32 : i32, i32
  }
  func.func @transform_1(%arg0: i32) -> (i32, i32) {
    %c0_i32 = arith.constant 0 : i32
    %c0_i32_0 = arith.constant 0 : i32
    return %arg0, %c0_i32 : i32, i32
  }
  func.func @transform_2(%arg0: i32) -> (i32, i32) {
    %c0_i32 = arith.constant 0 : i32
    %c0_i32_0 = arith.constant 0 : i32
    %c0_i32_1 = arith.constant 0 : i32
    return %c0_i32, %c0_i32_0 : i32, i32
  }
  func.func @transform_3(%arg0: i32) -> (i32, i32) {
    %c0_i32 = arith.constant 0 : i32
    %c0_i32_0 = arith.constant 0 : i32
    %c0_i32_1 = arith.constant 0 : i32
    return %c0_i32, %c0_i32_0 : i32, i32
  }
  func.func @transform_4(%arg0: i32) -> (i32, i32) {
    %c0_i32 = arith.constant 0 : i32
    %c0_i32_0 = arith.constant 0 : i32
    %c0_i32_1 = arith.constant 0 : i32
    return %c0_i32, %c0_i32_0 : i32, i32
  }
  func.func @transform_5(%arg0: i32) -> (i32, i32) {
    %c0_i32 = arith.constant 0 : i32
    %c0_i32_0 = arith.constant 0 : i32
    %c0_i32_1 = arith.constant 0 : i32
    return %c0_i32, %c0_i32_0 : i32, i32
  }
  func.func @transform_6(%arg0: i32) -> (i32, i32) {
    %c0_i32 = arith.constant 0 : i32
    %c0_i32_0 = arith.constant 0 : i32
    %c0_i32_1 = arith.constant 0 : i32
    return %c0_i32, %c0_i32_0 : i32, i32
  }
  func.func @transform_7(%arg0: i32) -> (i32, i32) {
    %c0_i32 = arith.constant 0 : i32
    %c0_i32_0 = arith.constant 0 : i32
    %c0_i32_1 = arith.constant 0 : i32
    return %c0_i32, %c0_i32_0 : i32, i32
  }
  func.func @transform_8(%arg0: i32) -> (i32, i32) {
    %c0_i32 = arith.constant 0 : i32
    %c0_i32_0 = arith.constant 0 : i32
    %c0_i32_1 = arith.constant 0 : i32
    return %c0_i32, %c0_i32_0 : i32, i32
  }
  func.func @transform_9(%arg0: i32) -> (i32, i32) {
    %c0_i32 = arith.constant 0 : i32
    %c0_i32_0 = arith.constant 0 : i32
    return %arg0, %c0_i32 : i32, i32
  }
}

</mosaic_0001>

<llo_original>
// kernel: mvsnerf_pallas.1
$region0: #{mvsnerf_pallas.1}
  #allocation0 [shape = 'u32[]', space=smem, size = 0x4, offset = 0x4, fixed_abs, tag = 'smem constant byte address 0x4 - core index']
  #allocation1 [shape = 'u32[144,128]{1,0:T(1,128)}', space=vmem, size = 0x12000, scoped, tag = 'internal scratch']
  %s0 = inlined_call_operand.vmem [shape: bf16[1024,8], index: 0, kind: input, shape index: {}]
  %s1 = inlined_call_operand.vmem [shape: bf16[1024,69], index: 1, kind: input, shape index: {}]
  %s2 = inlined_call_operand.vmem [shape: bf16[8,64], index: 2, kind: input, shape index: {}]
  %s3 = inlined_call_operand.vmem [shape: bf16[69,64], index: 3, kind: input, shape index: {}]
  %s4 = inlined_call_operand.vmem [shape: f32[1,64], index: 4, kind: input, shape index: {}]
  %s5 = inlined_call_operand.vmem [shape: bf16[64,64], index: 5, kind: input, shape index: {}]
  %s6 = inlined_call_operand.vmem [shape: f32[1,64], index: 6, kind: input, shape index: {}]
  %s7 = inlined_call_operand.vmem [shape: bf16[128,4], index: 7, kind: input, shape index: {}]
  %s8 = inlined_call_operand.vmem [shape: f32[1,4], index: 8, kind: input, shape index: {}]
  %s9 = inlined_call_operand.vmem [shape: f32[1024,4], index: 9, kind: output, shape index: {}]
  %s10 = sld [smem:[#allocation0]]
  $region69: #{mvsnerf_pallas.1} parent=0
    _
  %s12 = ssub.s32 1, %s10
  %s13 = scalar_select 0, %s12, %s10
  loop: start=0, step=1, limit=6
  $region2: #{mvsnerf_pallas.1} parent=0 // loop_pre_header
    _
  $region3: #{mvsnerf_pallas.1} parent=0 // loop_header
    %s15 = sphi 0, %s19
    %p16 = scmp.ge.s32.totalorder %s15, 6
    %s25 = sphi 0, %s27
    %s28 = sphi 0, %s25
    %s29 = sphi 0, %s28
    %s45 = sphi 0, %s29
    %s51 = sphi 0, %s53
    %s54 = sphi 0, %s51
    %s55 = sphi 0, %s54
    %s71 = sphi 0, %s55
    %s75 = sphi 0, %s75
    %s77 = sphi 0, %s75
    %s78 = sphi 0, %s77
    %s92 = sphi 0, %s78
    %s96 = sphi 0, %s96
    %s98 = sphi 0, %s96
    %s99 = sphi 0, %s98
    %s113 = sphi 0, %s99
    %s117 = sphi 0, %s117
    %s119 = sphi 0, %s117
    %s120 = sphi 0, %s119
    %s134 = sphi 0, %s120
    %s138 = sphi 0, %s138
    %s140 = sphi 0, %s138
    %s141 = sphi 0, %s140
    %s155 = sphi 0, %s141
    %s159 = sphi 0, %s159
    %s161 = sphi 0, %s159
    %s162 = sphi 0, %s161
    %s176 = sphi 0, %s162
    %s180 = sphi 0, %s180
    %s182 = sphi 0, %s180
    %s183 = sphi 0, %s182
    %s197 = sphi 0, %s183
    %s201 = sphi 0, %s201
    %s203 = sphi 0, %s201
    %s204 = sphi 0, %s203
    %s218 = sphi 0, %s204
    %s224 = sphi 0, %s226
    %s227 = sphi 0, %s224
    %s228 = sphi 0, %s227
    %s244 = sphi 0, %s228
  $region4: #{mvsnerf_pallas.1} parent=0 // loop_header_branch
    %18 = sbr.rel (%p16) target = $region8
  $region5: #{mvsnerf_pallas.1} parent=0 // loop_body
    %s20 = ssub.s32 %s15, 1
    %s21 = ssub.s32 %s15, 2
    %s22 = sadd.s32 %s15, 1
    %s23 = ssub.s32 %s15, %s22
    %p24 = scmp.eq.s32.totalorder %s23, 0
    %s26 = sadd.s32 %s25, 1
    %s27 = scalar_select %p24, %s25, %s26
    %p30 = pneg %p24
    %p31 = scmp.eq.s32.totalorder %s15, 3
    %p32 = por %p30, %p31
    %p33 = scmp.ne.s32.totalorder %s25, %s28
    %p34 = scmp.eq.s32.totalorder %s15, 0
    %p35 = por %p33, %p34
    %p36 = scmp.ne.s32.totalorder %s25, %s28
    %p37 = scmp.eq.s32.totalorder %s20, 3
    %p38 = por %p36, %p37
    %p39 = scmp.ne.s32.totalorder %s28, %s29
    %p40 = scmp.eq.s32.totalorder %s20, 0
    %p41 = por %p39, %p40
    %p42 = scmp.ne.s32.totalorder %s28, %s29
    %p43 = scmp.eq.s32.totalorder %s21, 3
    %p44 = por %p42, %p43
    %p46 = scmp.ne.s32.totalorder %s29, %s45
    %p47 = scmp.eq.s32.totalorder %s21, 0
    %p48 = por %p46, %p47
    %s49 = ssub.s32 %s15, %s22
    %p50 = scmp.eq.s32.totalorder %s49, 0
    %s52 = sadd.s32 %s51, 1
    %s53 = scalar_select %p50, %s51, %s52
    %p56 = pneg %p50
    %p57 = scmp.eq.s32.totalorder %s15, 3
    %p58 = por %p56, %p57
    %p59 = scmp.ne.s32.totalorder %s51, %s54
    %p60 = scmp.eq.s32.totalorder %s15, 0
    %p61 = por %p59, %p60
    %p62 = scmp.ne.s32.totalorder %s51, %s54
    %p63 = scmp.eq.s32.totalorder %s20, 3
    %p64 = por %p62, %p63
    %p65 = scmp.ne.s32.totalorder %s54, %s55
    %p66 = scmp.eq.s32.totalorder %s20, 0
    %p67 = por %p65, %p66
    %p68 = scmp.ne.s32.totalorder %s54, %s55
    %p69 = scmp.eq.s32.totalorder %s21, 3
    %p70 = por %p68, %p69
    %p72 = scmp.ne.s32.totalorder %s55, %s71
    %p73 = scmp.eq.s32.totalorder %s21, 0
    %p74 = por %p72, %p73
    %s76 = sadd.s32 %s75, 1
    %p79 = scmp.eq.s32.totalorder %s15, 3
    %p80 = scmp.ne.s32.totalorder %s75, %s77
    %p81 = scmp.eq.s32.totalorder %s15, 0
    %p82 = por %p80, %p81
    %p83 = scmp.ne.s32.totalorder %s75, %s77
    %p84 = scmp.eq.s32.totalorder %s20, 3
    %p85 = por %p83, %p84
    %p86 = scmp.ne.s32.totalorder %s77, %s78
    %p87 = scmp.eq.s32.totalorder %s20, 0
    %p88 = por %p86, %p87
    %p89 = scmp.ne.s32.totalorder %s77, %s78
    %p90 = scmp.eq.s32.totalorder %s21, 3
    %p91 = por %p89, %p90
    %p93 = scmp.ne.s32.totalorder %s78, %s92
    %p94 = scmp.eq.s32.totalorder %s21, 0
    %p95 = por %p93, %p94
    %s97 = sadd.s32 %s96, 1
    %p100 = scmp.eq.s32.totalorder %s15, 3
    %p101 = scmp.ne.s32.totalorder %s96, %s98
    %p102 = scmp.eq.s32.totalorder %s15, 0
    %p103 = por %p101, %p102
    %p104 = scmp.ne.s32.totalorder %s96, %s98
    %p105 = scmp.eq.s32.totalorder %s20, 3
    %p106 = por %p104, %p105
    %p107 = scmp.ne.s32.totalorder %s98, %s99
    %p108 = scmp.eq.s32.totalorder %s20, 0
    %p109 = por %p107, %p108
    %p110 = scmp.ne.s32.totalorder %s98, %s99
    %p111 = scmp.eq.s32.totalorder %s21, 3
    %p112 = por %p110, %p111
    %p114 = scmp.ne.s32.totalorder %s99, %s113
    %p115 = scmp.eq.s32.totalorder %s21, 0
    %p116 = por %p114, %p115
    %s118 = sadd.s32 %s117, 1
    %p121 = scmp.eq.s32.totalorder %s15, 3
    %p122 = scmp.ne.s32.totalorder %s117, %s119
    %p123 = scmp.eq.s32.totalorder %s15, 0
    %p124 = por %p122, %p123
    %p125 = scmp.ne.s32.totalorder %s117, %s119
    %p126 = scmp.eq.s32.totalorder %s20, 3
    %p127 = por %p125, %p126
    %p128 = scmp.ne.s32.totalorder %s119, %s120
    %p129 = scmp.eq.s32.totalorder %s20, 0
    %p130 = por %p128, %p129
    %p131 = scmp.ne.s32.totalorder %s119, %s120
    %p132 = scmp.eq.s32.totalorder %s21, 3
    %p133 = por %p131, %p132
    %p135 = scmp.ne.s32.totalorder %s120, %s134
    %p136 = scmp.eq.s32.totalorder %s21, 0
    %p137 = por %p135, %p136
    %s139 = sadd.s32 %s138, 1
    %p142 = scmp.eq.s32.totalorder %s15, 3
    %p143 = scmp.ne.s32.totalorder %s138, %s140
    %p144 = scmp.eq.s32.totalorder %s15, 0
    %p145 = por %p143, %p144
    %p146 = scmp.ne.s32.totalorder %s138, %s140
    %p147 = scmp.eq.s32.totalorder %s20, 3
    %p148 = por %p146, %p147
    %p149 = scmp.ne.s32.totalorder %s140, %s141
    %p150 = scmp.eq.s32.totalorder %s20, 0
    %p151 = por %p149, %p150
    %p152 = scmp.ne.s32.totalorder %s140, %s141
    %p153 = scmp.eq.s32.totalorder %s21, 3
    %p154 = por %p152, %p153
    %p156 = scmp.ne.s32.totalorder %s141, %s155
    %p157 = scmp.eq.s32.totalorder %s21, 0
    %p158 = por %p156, %p157
    %s160 = sadd.s32 %s159, 1
    %p163 = scmp.eq.s32.totalorder %s15, 3
    %p164 = scmp.ne.s32.totalorder %s159, %s161
    %p165 = scmp.eq.s32.totalorder %s15, 0
    %p166 = por %p164, %p165
    %p167 = scmp.ne.s32.totalorder %s159, %s161
    %p168 = scmp.eq.s32.totalorder %s20, 3
    %p169 = por %p167, %p168
    %p170 = scmp.ne.s32.totalorder %s161, %s162
    %p171 = scmp.eq.s32.totalorder %s20, 0
    %p172 = por %p170, %p171
    %p173 = scmp.ne.s32.totalorder %s161, %s162
    %p174 = scmp.eq.s32.totalorder %s21, 3
    %p175 = por %p173, %p174
    %p177 = scmp.ne.s32.totalorder %s162, %s176
    %p178 = scmp.eq.s32.totalorder %s21, 0
    %p179 = por %p177, %p178
    %s181 = sadd.s32 %s180, 1
    %p184 = scmp.eq.s32.totalorder %s15, 3
    %p185 = scmp.ne.s32.totalorder %s180, %s182
    %p186 = scmp.eq.s32.totalorder %s15, 0
    %p187 = por %p185, %p186
    %p188 = scmp.ne.s32.totalorder %s180, %s182
    %p189 = scmp.eq.s32.totalorder %s20, 3
    %p190 = por %p188, %p189
    %p191 = scmp.ne.s32.totalorder %s182, %s183
    %p192 = scmp.eq.s32.totalorder %s20, 0
    %p193 = por %p191, %p192
    %p194 = scmp.ne.s32.totalorder %s182, %s183
    %p195 = scmp.eq.s32.totalorder %s21, 3
    %p196 = por %p194, %p195
    %p198 = scmp.ne.s32.totalorder %s183, %s197
    %p199 = scmp.eq.s32.totalorder %s21, 0
    %p200 = por %p198, %p199
    %s202 = sadd.s32 %s201, 1
    %p205 = scmp.eq.s32.totalorder %s15, 3
    %p206 = scmp.ne.s32.totalorder %s201, %s203
    %p207 = scmp.eq.s32.totalorder %s15, 0
    %p208 = por %p206, %p207
    %p209 = scmp.ne.s32.totalorder %s201, %s203
    %p210 = scmp.eq.s32.totalorder %s20, 3
    %p211 = por %p209, %p210
    %p212 = scmp.ne.s32.totalorder %s203, %s204
    %p213 = scmp.eq.s32.totalorder %s20, 0
    %p214 = por %p212, %p213
    %p215 = scmp.ne.s32.totalorder %s203, %s204
    %p216 = scmp.eq.s32.totalorder %s21, 3
    %p217 = por %p215, %p216
    %p219 = scmp.ne.s32.totalorder %s204, %s218
    %p220 = scmp.eq.s32.totalorder %s21, 0
    %p221 = por %p219, %p220
    %s222 = ssub.s32 %s15, %s22
    %p223 = scmp.eq.s32.totalorder %s222, 0
    %s225 = sadd.s32 %s224, 1
    %s226 = scalar_select %p223, %s224, %s225
    %p229 = pneg %p223
    %p230 = scmp.eq.s32.totalorder %s15, 3
    %p231 = por %p229, %p230
    %p232 = scmp.ne.s32.totalorder %s224, %s227
    %p233 = scmp.eq.s32.totalorder %s15, 0
    %p234 = por %p232, %p233
    %p235 = scmp.ne.s32.totalorder %s224, %s227
    %p236 = scmp.eq.s32.totalorder %s20, 3
    %p237 = por %p235, %p236
    %p238 = scmp.ne.s32.totalorder %s227, %s228
    %p239 = scmp.eq.s32.totalorder %s20, 0
    %p240 = por %p238, %p239
    %p241 = scmp.ne.s32.totalorder %s227, %s228
    %p242 = scmp.eq.s32.totalorder %s21, 3
    %p243 = por %p241, %p242
    %p245 = scmp.ne.s32.totalorder %s228, %s244
    %p246 = scmp.eq.s32.totalorder %s21, 0
    %p247 = por %p245, %p246
    %p248 = scmp.le.s32.totalorder 1, %s15
    %p249 = scmp.lt.s32.totalorder %s15, 5
    %p250 = pnand %p248, %p249
    %p251 = pneg %p250
    // Predicated region
    $region9: #{mvsnerf_pallas.1} parent=5 // pred_check
      _
    $region10: #{mvsnerf_pallas.1} parent=5 // pred_check_branch
      %253 = sbr.rel (%p250) target = $region12
    $region11: #{mvsnerf_pallas.1} parent=5 // pred_region
      %s254 = ssub.s32 %s15, 1
      // Predicated region
      $region13: #{mvsnerf_pallas.1} parent=11 // pred_check
        %p255 = pneg %p88
      $region14: #{mvsnerf_pallas.1} parent=11 // pred_check_branch
        %257 = sbr.rel (%p255) target = $region16
      $region15: #{mvsnerf_pallas.1} parent=11 // pred_region
        _
      $region16: #{mvsnerf_pallas.1} parent=11 // pred_fallthru
        _
      // Predicated region
      $region17: #{mvsnerf_pallas.1} parent=11 // pred_check
        %p258 = pneg %p109
      $region18: #{mvsnerf_pallas.1} parent=11 // pred_check_branch
        %260 = sbr.rel (%p258) target = $region20
      $region19: #{mvsnerf_pallas.1} parent=11 // pred_region
        _
      $region20: #{mvsnerf_pallas.1} parent=11 // pred_fallthru
        _
      // Predicated region
      $region21: #{mvsnerf_pallas.1} parent=11 // pred_check
        %p261 = pneg %p130
      $region22: #{mvsnerf_pallas.1} parent=11 // pred_check_branch
        %263 = sbr.rel (%p261) target = $region24
      $region23: #{mvsnerf_pallas.1} parent=11 // pred_region
        _
      $region24: #{mvsnerf_pallas.1} parent=11 // pred_fallthru
        _
      // Predicated region
      $region25: #{mvsnerf_pallas.1} parent=11 // pred_check
        %p264 = pneg %p151
      $region26: #{mvsnerf_pallas.1} parent=11 // pred_check_branch
        %266 = sbr.rel (%p264) target = $region28
      $region27: #{mvsnerf_pallas.1} parent=11 // pred_region
        _
      $region28: #{mvsnerf_pallas.1} parent=11 // pred_fallthru
        _
      // Predicated region
      $region29: #{mvsnerf_pallas.1} parent=11 // pred_check
        %p267 = pneg %p172
      $region30: #{mvsnerf_pallas.1} parent=11 // pred_check_branch
        %269 = sbr.rel (%p267) target = $region32
      $region31: #{mvsnerf_pallas.1} parent=11 // pred_region
        _
      $region32: #{mvsnerf_pallas.1} parent=11 // pred_fallthru
        _
      // Predicated region
      $region33: #{mvsnerf_pallas.1} parent=11 // pred_check
        %p270 = pneg %p193
      $region34: #{mvsnerf_pallas.1} parent=11 // pred_check_branch
        %272 = sbr.rel (%p270) target = $region36
      $region35: #{mvsnerf_pallas.1} parent=11 // pred_region
        _
      $region36: #{mvsnerf_pallas.1} parent=11 // pred_fallthru
        _
      // Predicated region
      $region37: #{mvsnerf_pallas.1} parent=11 // pred_check
        %p273 = pneg %p214
      $region38: #{mvsnerf_pallas.1} parent=11 // pred_check_branch
        %275 = sbr.rel (%p273) target = $region40
      $region39: #{mvsnerf_pallas.1} parent=11 // pred_region
        _
      $region40: #{mvsnerf_pallas.1} parent=11 // pred_fallthru
        _
    $region12: #{mvsnerf_pallas.1} parent=5 // pred_fallthru
      _
    %p276 = scmp.lt.s32.totalorder %s15, 4
    // Predicated region
    $region41: #{mvsnerf_pallas.1} parent=5 // pred_check
      %p277 = pneg %p276
    $region42: #{mvsnerf_pallas.1} parent=5 // pred_check_branch
      %279 = sbr.rel (%p277) target = $region44
    $region43: #{mvsnerf_pallas.1} parent=5 // pred_region
      // Predicated region
      $region45: #{mvsnerf_pallas.1} parent=43 // pred_check
        %p280 = pneg %p35
      $region46: #{mvsnerf_pallas.1} parent=43 // pred_check_branch
        %282 = sbr.rel (%p280) target = $region48
      $region47: #{mvsnerf_pallas.1} parent=43 // pred_region
        %s283 = smul.u32 32, %s15
        %p284 = scmp.lt.s32.totalorder %s283, 127
        %s285 = scalar_select %p284, %s283, 127
        %s286 = smul.addr %s285, 4
        %s287 = scalar_lea.vmem %s0, %s286
        %s288 = smul.u32 32, %s15
      $region48: #{mvsnerf_pallas.1} parent=43 // pred_fallthru
        _
      // Predicated region
      $region49: #{mvsnerf_pallas.1} parent=43 // pred_check
        %p289 = pneg %p61
      $region50: #{mvsnerf_pallas.1} parent=43 // pred_check_branch
        %291 = sbr.rel (%p289) target = $region52
      $region51: #{mvsnerf_pallas.1} parent=43 // pred_region
        %s292 = smul.u32 32, %s15
        %p293 = scmp.lt.s32.totalorder %s292, 127
        %s294 = scalar_select %p293, %s292, 127
        %s295 = smul.addr %s294, 4
        %s296 = scalar_lea.vmem %s1, %s295
        %s297 = smul.u32 32, %s15
      $region52: #{mvsnerf_pallas.1} parent=43 // pred_fallthru
        _
    $region44: #{mvsnerf_pallas.1} parent=5 // pred_fallthru
      _
    %p298 = scmp.le.s32.totalorder 1, %s15
    %p299 = scmp.lt.s32.totalorder %s15, 5
    %p300 = pnand %p298, %p299
    %p301 = pneg %p300
    // Predicated region
    $region53: #{mvsnerf_pallas.1} parent=5 // pred_check
      _
    $region54: #{mvsnerf_pallas.1} parent=5 // pred_check_branch
      %303 = sbr.rel (%p300) target = $region56
    $region55: #{mvsnerf_pallas.1} parent=5 // pred_region
      %s304 = ssub.s32 %s15, 1
      %s305 = smul.u32 32, %s20
      %p306 = scmp.lt.s32.totalorder %s305, 127
      %s307 = scalar_select %p306, %s305, 127
      %s308 = smul.addr %s307, 4
      %s309 = scalar_lea.vmem %s0, %s308
      %p310 = pneg %p41
      %p311 = pneg %p38
      %s312 = smul.u32 32, %s20
      %p313 = scmp.lt.s32.totalorder %s312, 127
      %s314 = scalar_select %p313, %s312, 127
      %s315 = smul.addr %s314, 4
      %s316 = scalar_lea.vmem %s1, %s315
      %p317 = pneg %p67
      %p318 = pneg %p64
      %p319 = pneg %p88
      %p320 = pneg %p85
      %p321 = pneg %p109
      %p322 = pneg %p106
      %p323 = pneg %p130
      %p324 = pneg %p127
      %p325 = pneg %p151
      %p326 = pneg %p148
      %p327 = pneg %p172
      %p328 = pneg %p169
      %p329 = pneg %p193
      %p330 = pneg %p190
      %p331 = pneg %p214
      %p332 = pneg %p211
      %p333 = pneg %p240
      %p334 = pneg %p237
      %s335 = smul.u32 32, %s20
      %p336 = scmp.lt.s32.totalorder %s335, 127
      %s337 = scalar_select %p336, %s335, 127
      %s338 = smul.addr %s337, 8
      %s339 = scalar_lea.vmem %s9, %s338
      %s340 = smul.u32 32, %s20
      %p341 = scmp.lt.s32.totalorder %s340, 127
      %s342 = scalar_select %p341, %s340, 127
      %s343 = smul.addr %s342, 4
      %s344 = scalar_lea.vmem %s0, %s343
      %s345 = smul.u32 32, %s20
      %s346 = smul.u32 32, %s20
      %p347 = scmp.lt.s32.totalorder %s346, 127
      %s348 = scalar_select %p347, %s346, 127
      %s349 = smul.addr %s348, 4
      %s350 = scalar_lea.vmem %s1, %s349
      %s351 = smul.u32 32, %s20
      %s352 = smul.u32 32, %s20
      %p353 = scmp.lt.s32.totalorder %s352, 127
      %s354 = scalar_select %p353, %s352, 127
      %s355 = smul.addr %s354, 8
      %s356 = scalar_lea.vmem %s9, %s355
      %s357 = smul.u32 32, %s20
      %v359 = vld [vmem:[%s344] sm:$0xf]
      %v360 = vld [vmem:[%s344 + $0x4] sm:$0xf]
      %v361 = vld [vmem:[%s344 + $0x8] sm:$0xf]
      %v362 = vld [vmem:[%s344 + $0xc] sm:$0xf]
      %v363 = vld [vmem:[%s344 + $0x10] sm:$0xf]
      %v364 = vld [vmem:[%s344 + $0x14] sm:$0xf]
      %v365 = vld [vmem:[%s344 + $0x18] sm:$0xf]
      %v366 = vld [vmem:[%s344 + $0x1c] sm:$0xf]
      %v367 = vld [vmem:[%s344 + $0x20] sm:$0xf]
      %v368 = vld [vmem:[%s344 + $0x24] sm:$0xf]
      %v369 = vld [vmem:[%s344 + $0x28] sm:$0xf]
      %v370 = vld [vmem:[%s344 + $0x2c] sm:$0xf]
      %v371 = vld [vmem:[%s344 + $0x30] sm:$0xf]
      %v372 = vld [vmem:[%s344 + $0x34] sm:$0xf]
      %v373 = vld [vmem:[%s344 + $0x38] sm:$0xf]
      %v374 = vld [vmem:[%s344 + $0x3c] sm:$0xf]
      %v375 = vld [vmem:[%s344 + $0x40] sm:$0xf]
      %v376 = vld [vmem:[%s344 + $0x44] sm:$0xf]
      %v377 = vld [vmem:[%s344 + $0x48] sm:$0xf]
      %v378 = vld [vmem:[%s344 + $0x4c] sm:$0xf]
      %v379 = vld [vmem:[%s344 + $0x50] sm:$0xf]
      %v380 = vld [vmem:[%s344 + $0x54] sm:$0xf]
      %v381 = vld [vmem:[%s344 + $0x58] sm:$0xf]
      %v382 = vld [vmem:[%s344 + $0x5c] sm:$0xf]
      %v383 = vld [vmem:[%s344 + $0x60] sm:$0xf]
      %v384 = vld [vmem:[%s344 + $0x64] sm:$0xf]
      %v385 = vld [vmem:[%s344 + $0x68] sm:$0xf]
      %v386 = vld [vmem:[%s344 + $0x6c] sm:$0xf]
      %v387 = vld [vmem:[%s344 + $0x70] sm:$0xf]
      %v388 = vld [vmem:[%s344 + $0x74] sm:$0xf]
      %v389 = vld [vmem:[%s344 + $0x78] sm:$0xf]
      %v390 = vld [vmem:[%s344 + $0x7c] sm:$0xf]
      %v391 = vld [vmem:[%s2] sm:$0xf]
      %v392 = vld [vmem:[%s350] sm:$0xf]
      %v393 = vld [vmem:[%s350 + $0x4] sm:$0xf]
      %v394 = vld [vmem:[%s350 + $0x8] sm:$0xf]
      %v395 = vld [vmem:[%s350 + $0xc] sm:$0xf]
      %v396 = vld [vmem:[%s350 + $0x10] sm:$0xf]
      %v397 = vld [vmem:[%s350 + $0x14] sm:$0xf]
      %v398 = vld [vmem:[%s350 + $0x18] sm:$0xf]
      %v399 = vld [vmem:[%s350 + $0x1c] sm:$0xf]
      %v400 = vld [vmem:[%s350 + $0x20] sm:$0xf]
      %v401 = vld [vmem:[%s350 + $0x24] sm:$0xf]
      %v402 = vld [vmem:[%s350 + $0x28] sm:$0xf]
      %v403 = vld [vmem:[%s350 + $0x2c] sm:$0xf]
      %v404 = vld [vmem:[%s350 + $0x30] sm:$0xf]
      %v405 = vld [vmem:[%s350 + $0x34] sm:$0xf]
      %v406 = vld [vmem:[%s350 + $0x38] sm:$0xf]
      %v407 = vld [vmem:[%s350 + $0x3c] sm:$0xf]
      %v408 = vld [vmem:[%s350 + $0x40] sm:$0xf]
      %v409 = vld [vmem:[%s350 + $0x44] sm:$0xf]
      %v410 = vld [vmem:[%s350 + $0x48] sm:$0xf]
      %v411 = vld [vmem:[%s350 + $0x4c] sm:$0xf]
      %v412 = vld [vmem:[%s350 + $0x50] sm:$0xf]
      %v413 = vld [vmem:[%s350 + $0x54] sm:$0xf]
      %v414 = vld [vmem:[%s350 + $0x58] sm:$0xf]
      %v415 = vld [vmem:[%s350 + $0x5c] sm:$0xf]
      %v416 = vld [vmem:[%s350 + $0x60] sm:$0xf]
      %v417 = vld [vmem:[%s350 + $0x64] sm:$0xf]
      %v418 = vld [vmem:[%s350 + $0x68] sm:$0xf]
      %v419 = vld [vmem:[%s350 + $0x6c] sm:$0xf]
      %v420 = vld [vmem:[%s350 + $0x70] sm:$0xf]
      %v421 = vld [vmem:[%s350 + $0x74] sm:$0xf]
      %v422 = vld [vmem:[%s350 + $0x78] sm:$0xf]
      %v423 = vld [vmem:[%s350 + $0x7c] sm:$0xf]
      %v424 = vld [vmem:[%s3] sm:$0xf]
      %v425 = vld [vmem:[%s3 + $0x4] sm:$0xf]
      %v426 = vld [vmem:[%s3 + $0x8] sm:$0xf]
      %v427 = vld [vmem:[%s3 + $0xc] sm:$0xf]
      %v428 = vld [vmem:[%s3 + $0x10] sm:$0xf]
      %v429 = vld [vmem:[%s3 + $0x14] sm:$0xf]
      %v430 = vld [vmem:[%s3 + $0x18] sm:$0xf]
      %v431 = vld [vmem:[%s3 + $0x1c] sm:$0xf]
      %v432 = vld [vmem:[%s3 + $0x20] sm:$0x7]
      %v465 = vunpack.c.l.b16 %v392
      %v466 = vunpack.c.l.b16 %v393
      %v467 = vunpack.c.l.b16 %v394
      %v468 = vunpack.c.l.b16 %v395
      %v469 = vunpack.c.l.b16 %v396
      %v470 = vunpack.c.l.b16 %v397
      %v471 = vunpack.c.l.b16 %v398
      %v472 = vunpack.c.l.b16 %v399
      %v473 = vunpack.c.l.b16 %v400
      %v474 = vunpack.c.l.b16 %v401
      %v475 = vunpack.c.l.b16 %v402
      %v476 = vunpack.c.l.b16 %v403
      %v477 = vunpack.c.l.b16 %v404
      %v478 = vunpack.c.l.b16 %v405
      %v479 = vunpack.c.l.b16 %v406
      %v480 = vunpack.c.l.b16 %v407
      %v481 = vunpack.c.l.b16 %v408
      %v482 = vunpack.c.l.b16 %v409
      %v483 = vunpack.c.l.b16 %v410
      %v484 = vunpack.c.l.b16 %v411
      %v485 = vunpack.c.l.b16 %v412
      %v486 = vunpack.c.l.b16 %v413
      %v487 = vunpack.c.l.b16 %v414
      %v488 = vunpack.c.l.b16 %v415
      %v489 = vunpack.c.l.b16 %v416
      %v490 = vunpack.c.l.b16 %v417
      %v491 = vunpack.c.l.b16 %v418
      %v492 = vunpack.c.l.b16 %v419
      %v493 = vunpack.c.l.b16 %v420
      %v494 = vunpack.c.l.b16 %v421
      %v495 = vunpack.c.l.b16 %v422
      %v496 = vunpack.c.l.b16 %v423
      %v497 = vpack.c.b16 %v466, %v465
      %v498 = vpack.c.b16 %v468, %v467
      %v499 = vpack.c.b16 %v470, %v469
      %v500 = vpack.c.b16 %v472, %v471
      %v501 = vpack.c.b16 %v474, %v473
      %v502 = vpack.c.b16 %v476, %v475
      %v503 = vpack.c.b16 %v478, %v477
      %v504 = vpack.c.b16 %v480, %v479
      %v505 = vpack.c.b16 %v482, %v481
      %v506 = vpack.c.b16 %v484, %v483
      %v507 = vpack.c.b16 %v486, %v485
      %v508 = vpack.c.b16 %v488, %v487
      %v509 = vpack.c.b16 %v490, %v489
      %v510 = vpack.c.b16 %v492, %v491
      %v511 = vpack.c.b16 %v494, %v493
      %v512 = vpack.c.b16 %v496, %v495
      %v522 = vunpack.c.l.b16 %v424
      %v523 = vunpack.c.l.b16 %v425
      %v524 = vunpack.c.l.b16 %v426
      %v525 = vunpack.c.l.b16 %v427
      %v526 = vunpack.c.l.b16 %v428
      %v527 = vunpack.c.l.b16 %v429
      %v528 = vunpack.c.l.b16 %v430
      %v529 = vunpack.c.l.b16 %v431
      %v530 = vunpack.c.l.b16 %v432
      %v531 = vpack.c.b16 %v523, %v522
      %v532 = vpack.c.b16 %v525, %v524
      %v533 = vpack.c.b16 %v527, %v526
      %v534 = vpack.c.b16 %v529, %v528
      %v535 = vpack.c.b16 %v530, %v530
      %vm540 = vcmask 564224
      %v542 = vsel %vm540, %v497, 0
      %v545 = vsel %vm540, %v498, 0
      %v548 = vsel %vm540, %v499, 0
      %v551 = vsel %vm540, %v500, 0
      %v554 = vsel %vm540, %v501, 0
      %v557 = vsel %vm540, %v502, 0
      %v560 = vsel %vm540, %v503, 0
      %v563 = vsel %vm540, %v504, 0
      %v566 = vsel %vm540, %v505, 0
      %v569 = vsel %vm540, %v506, 0
      %v572 = vsel %vm540, %v507, 0
      %v575 = vsel %vm540, %v508, 0
      %v578 = vsel %vm540, %v509, 0
      %v581 = vsel %vm540, %v510, 0
      %v584 = vsel %vm540, %v511, 0
      %v587 = vsel %vm540, %v512, 0
      %vm589 = vcmask 1041408
      %vm590 = vcmask 1042432
      %v591 = vsel %vm589, 4294967295, 65535
      %v592 = vsel %vm590, %v591, 0
      %v594 = vand.u32 %v535, %v592
      %596 = vmatprep.subr.bf16.mxu0 0
      %597 = vmatpush1.bf16.msra.mxu0 %v531
      %598 = vmatprep.subr.bf16.mxu0 0
      %599 = vmatpush1.bf16.msra.mxu0 %v532
      %600 = vmatprep.subr.bf16.mxu0 0
      %601 = vmatpush1.bf16.msra.mxu0 %v533
      %602 = vmatprep.subr.bf16.mxu0 0
      %603 = vmatpush1.bf16.msra.mxu0 %v534
      %604 = vmatprep.subr.bf16.mxu0 0
      %605 = vmatpush1.bf16.msra.mxu0 %v594
      %606 = vmatprep.subr.bf16.mxu0 0
      %607 = vmatpush1.bf16.msra.mxu0 0
      %608 = vmatprep.subr.bf16.mxu0 0
      %609 = vmatpush1.bf16.msra.mxu0 0
      %610 = vmatprep.subr.bf16.mxu0 0
      %611 = vmatpush1.bf16.msra.mxu0 0
      %612 = vmatprep.subr.bf16.mxu0 0
      %613 = vmatpush1.bf16.msra.mxu0 0
      %614 = vmatprep.subr.bf16.mxu0 0
      %615 = vmatpush1.bf16.msra.mxu0 0
      %616 = vmatprep.subr.bf16.mxu0 0
      %617 = vmatpush1.bf16.msra.mxu0 0
      %618 = vmatprep.subr.bf16.mxu0 0
      %619 = vmatpush1.bf16.msra.mxu0 0
      %620 = vmatprep.subr.bf16.mxu0 0
      %621 = vmatpush1.bf16.msra.mxu0 0
      %622 = vmatprep.subr.bf16.mxu0 0
      %623 = vmatpush1.bf16.msra.mxu0 0
      %624 = vmatprep.subr.bf16.mxu0 0
      %625 = vmatpush1.bf16.msra.mxu0 0
      %626 = vmatprep.subr.bf16.mxu0 0
      %627 = vmatpush1.bf16.msra.mxu0 0
      %628 = vmatprep.mubr.bf16.mxu0 0
      %629 = vmatmul.mubr.bf16.gmra.mrb[0].mxu0 %v542
      %v630 = vpop.f32.mrb[0].mxu0
      %v631 = vadd.f32 0.0, %v630
      %v632 = vpop.f32.mrb[0].mxu0
      %v633 = vpop.f32.mrb[0].mxu0
      %v634 = vadd.f32 0.0, %v633
      %v635 = vpop.f32.mrb[0].mxu0
      %636 = vmatprep.mubr.bf16.mxu0 0
      %637 = vmatmul.mubr.bf16.gmra.mrb[0].mxu0 %v545
      %v638 = vpop.f32.mrb[0].mxu0
      %v639 = vadd.f32 0.0, %v638
      %v640 = vpop.f32.mrb[0].mxu0
      %v641 = vpop.f32.mrb[0].mxu0
      %v642 = vadd.f32 0.0, %v641
      %v643 = vpop.f32.mrb[0].mxu0
      %644 = vmatprep.mubr.bf16.mxu0 0
      %645 = vmatmul.mubr.bf16.gmra.mrb[0].mxu0 %v548
      %v646 = vpop.f32.mrb[0].mxu0
      %v647 = vadd.f32 0.0, %v646
      %v648 = vpop.f32.mrb[0].mxu0
      %v649 = vpop.f32.mrb[0].mxu0
      %v650 = vadd.f32 0.0, %v649
      %v651 = vpop.f32.mrb[0].mxu0
      %652 = vmatprep.mubr.bf16.mxu0 0
      %653 = vmatmul.mubr.bf16.gmra.mrb[0].mxu0 %v551
      %v654 = vpop.f32.mrb[0].mxu0
      %v655 = vadd.f32 0.0, %v654
      %v656 = vpop.f32.mrb[0].mxu0
      %v657 = vpop.f32.mrb[0].mxu0
      %v658 = vadd.f32 0.0, %v657
      %v659 = vpop.f32.mrb[0].mxu0
      %660 = vmatprep.mubr.bf16.mxu0 0
      %661 = vmatmul.mubr.bf16.gmra.mrb[0].mxu0 %v554
      %v662 = vpop.f32.mrb[0].mxu0
      %v663 = vadd.f32 0.0, %v662
      %v664 = vpop.f32.mrb[0].mxu0
      %v665 = vpop.f32.mrb[0].mxu0
      %v666 = vadd.f32 0.0, %v665
      %v667 = vpop.f32.mrb[0].mxu0
      %668 = vmatprep.mubr.bf16.mxu0 0
      %669 = vmatmul.mubr.bf16.gmra.mrb[0].mxu0 %v557
      %v670 = vpop.f32.mrb[0].mxu0
      %v671 = vadd.f32 0.0, %v670
      %v672 = vpop.f32.mrb[0].mxu0
      %v673 = vpop.f32.mrb[0].mxu0
      %v674 = vadd.f32 0.0, %v673
      %v675 = vpop.f32.mrb[0].mxu0
      %676 = vmatprep.mubr.bf16.mxu0 0
      %677 = vmatmul.mubr.bf16.gmra.mrb[0].mxu0 %v560
      %v678 = vpop.f32.mrb[0].mxu0
      %v679 = vadd.f32 0.0, %v678
      %v680 = vpop.f32.mrb[0].mxu0
      %v681 = vpop.f32.mrb[0].mxu0
      %v682 = vadd.f32 0.0, %v681
      %v683 = vpop.f32.mrb[0].mxu0
      %684 = vmatprep.mubr.bf16.mxu0 0
      %685 = vmatmul.mubr.bf16.gmra.mrb[0].mxu0 %v563
      %v686 = vpop.f32.mrb[0].mxu0
      %v687 = vadd.f32 0.0, %v686
      %v688 = vpop.f32.mrb[0].mxu0
      %v689 = vpop.f32.mrb[0].mxu0
      %v690 = vadd.f32 0.0, %v689
      %v691 = vpop.f32.mrb[0].mxu0
      %692 = vmatprep.mubr.bf16.mxu0 0
      %693 = vmatmul.mubr.bf16.gmra.mrb[0].mxu0 %v566
      %v694 = vpop.f32.mrb[0].mxu0
      %v695 = vadd.f32 0.0, %v694
      %v696 = vpop.f32.mrb[0].mxu0
      %v697 = vpop.f32.mrb[0].mxu0
      %v698 = vadd.f32 0.0, %v697
      %v699 = vpop.f32.mrb[0].mxu0
      %700 = vmatprep.mubr.bf16.mxu0 0
      %701 = vmatmul.mubr.bf16.gmra.mrb[0].mxu0 %v569
      %v702 = vpop.f32.mrb[0].mxu0
      %v703 = vadd.f32 0.0, %v702
      %v704 = vpop.f32.mrb[0].mxu0
      %v705 = vpop.f32.mrb[0].mxu0
      %v706 = vadd.f32 0.0, %v705
      %v707 = vpop.f32.mrb[0].mxu0
      %708 = vmatprep.mubr.bf16.mxu0 0
      %709 = vmatmul.mubr.bf16.gmra.mrb[0].mxu0 %v572
      %v710 = vpop.f32.mrb[0].mxu0
      %v711 = vadd.f32 0.0, %v710
      %v712 = vpop.f32.mrb[0].mxu0
      %v713 = vpop.f32.mrb[0].mxu0
      %v714 = vadd.f32 0.0, %v713
      %v715 = vpop.f32.mrb[0].mxu0
      %716 = vmatprep.mubr.bf16.mxu0 0
      %717 = vmatmul.mubr.bf16.gmra.mrb[0].mxu0 %v575
      %v718 = vpop.f32.mrb[0].mxu0
      %v719 = vadd.f32 0.0, %v718
      %v720 = vpop.f32.mrb[0].mxu0
      %v721 = vpop.f32.mrb[0].mxu0
      %v722 = vadd.f32 0.0, %v721
      %v723 = vpop.f32.mrb[0].mxu0
      %724 = vmatprep.mubr.bf16.mxu0 0
      %725 = vmatmul.mubr.bf16.gmra.mrb[0].mxu0 %v578
      %v726 = vpop.f32.mrb[0].mxu0
      %v727 = vadd.f32 0.0, %v726
      %v728 = vpop.f32.mrb[0].mxu0
      %v729 = vpop.f32.mrb[0].mxu0
      %v730 = vadd.f32 0.0, %v729
      %v731 = vpop.f32.mrb[0].mxu0
      %732 = vmatprep.mubr.bf16.mxu0 0
      %733 = vmatmul.mubr.bf16.gmra.mrb[0].mxu0 %v581
      %v734 = vpop.f32.mrb[0].mxu0
      %v735 = vadd.f32 0.0, %v734
      %v736 = vpop.f32.mrb[0].mxu0
      %v737 = vpop.f32.mrb[0].mxu0
      %v738 = vadd.f32 0.0, %v737
      %v739 = vpop.f32.mrb[0].mxu0
      %740 = vmatprep.mubr.bf16.mxu0 0
      %741 = vmatmul.mubr.bf16.gmra.mrb[0].mxu0 %v584
      %v742 = vpop.f32.mrb[0].mxu0
      %v743 = vadd.f32 0.0, %v742
      %v744 = vpop.f32.mrb[0].mxu0
      %v745 = vpop.f32.mrb[0].mxu0
      %v746 = vadd.f32 0.0, %v745
      %v747 = vpop.f32.mrb[0].mxu0
      %748 = vmatprep.mubr.bf16.mxu0 0
      %749 = vmatmul.mubr.bf16.gmra.mrb[0].mxu0 %v587
      %v750 = vpop.f32.mrb[0].mxu0
      %v751 = vadd.f32 0.0, %v750
      %v752 = vpop.f32.mrb[0].mxu0
      %v753 = vpop.f32.mrb[0].mxu0
      %v754 = vadd.f32 0.0, %v753
      %v755 = vpop.f32.mrb[0].mxu0
      %756 = vdwg.mxu0
      %v789 = vunpack.c.l.b16 %v359
      %v790 = vunpack.c.l.b16 %v360
      %v791 = vunpack.c.l.b16 %v361
      %v792 = vunpack.c.l.b16 %v362
      %v793 = vunpack.c.l.b16 %v363
      %v794 = vunpack.c.l.b16 %v364
      %v795 = vunpack.c.l.b16 %v365
      %v796 = vunpack.c.l.b16 %v366
      %v797 = vunpack.c.l.b16 %v367
      %v798 = vunpack.c.l.b16 %v368
      %v799 = vunpack.c.l.b16 %v369
      %v800 = vunpack.c.l.b16 %v370
      %v801 = vunpack.c.l.b16 %v371
      %v802 = vunpack.c.l.b16 %v372
      %v803 = vunpack.c.l.b16 %v373
      %v804 = vunpack.c.l.b16 %v374
      %v805 = vunpack.c.l.b16 %v375
      %v806 = vunpack.c.l.b16 %v376
      %v807 = vunpack.c.l.b16 %v377
      %v808 = vunpack.c.l.b16 %v378
      %v809 = vunpack.c.l.b16 %v379
      %v810 = vunpack.c.l.b16 %v380
      %v811 = vunpack.c.l.b16 %v381
      %v812 = vunpack.c.l.b16 %v382
      %v813 = vunpack.c.l.b16 %v383
      %v814 = vunpack.c.l.b16 %v384
      %v815 = vunpack.c.l.b16 %v385
      %v816 = vunpack.c.l.b16 %v386
      %v817 = vunpack.c.l.b16 %v387
      %v818 = vunpack.c.l.b16 %v388
      %v819 = vunpack.c.l.b16 %v389
      %v820 = vunpack.c.l.b16 %v390
      %v821 = vpack.c.b16 %v790, %v789
      %v822 = vpack.c.b16 %v792, %v791
      %v823 = vpack.c.b16 %v794, %v793
      %v824 = vpack.c.b16 %v796, %v795
      %v825 = vpack.c.b16 %v798, %v797
      %v826 = vpack.c.b16 %v800, %v799
      %v827 = vpack.c.b16 %v802, %v801
      %v828 = vpack.c.b16 %v804, %v803
      %v829 = vpack.c.b16 %v806, %v805
      %v830 = vpack.c.b16 %v808, %v807
      %v831 = vpack.c.b16 %v810, %v809
      %v832 = vpack.c.b16 %v812, %v811
      %v833 = vpack.c.b16 %v814, %v813
      %v834 = vpack.c.b16 %v816, %v815
      %v835 = vpack.c.b16 %v818, %v817
      %v836 = vpack.c.b16 %v820, %v819
      %vm837 = vcmask 64512
      %v839 = vsel %vm837, %v821, 0
      %v842 = vsel %vm837, %v822, 0
      %v845 = vsel %vm837, %v823, 0
      %v848 = vsel %vm837, %v824, 0
      %v851 = vsel %vm837, %v825, 0
      %v854 = vsel %vm837, %v826, 0
      %v857 = vsel %vm837, %v827, 0
      %v860 = vsel %vm837, %v828, 0
      %v863 = vsel %vm837, %v829, 0
      %v866 = vsel %vm837, %v830, 0
      %v869 = vsel %vm837, %v831, 0
      %v872 = vsel %vm837, %v832, 0
      %v875 = vsel %vm837, %v833, 0
      %v878 = vsel %vm837, %v834, 0
      %v881 = vsel %vm837, %v835, 0
      %v884 = vsel %vm837, %v836, 0
      %vm886 = vcmask 1043456
      %v888 = vsel %vm886, %v391, 0
      %890 = vmatprep.subr.bf16.mxu0 0
      %891 = vmatpush1.bf16.msra.mxu0 %v888
      %892 = vmatprep.subr.bf16.mxu0 0
      %893 = vmatpush1.bf16.msra.mxu0 0
      %894 = vmatprep.subr.bf16.mxu0 0
      %895 = vmatpush1.bf16.msra.mxu0 0
      %896 = vmatprep.subr.bf16.mxu0 0
      %897 = vmatpush1.bf16.msra.mxu0 0
      %898 = vmatprep.subr.bf16.mxu0 0
      %899 = vmatpush1.bf16.msra.mxu0 0
      %900 = vmatprep.subr.bf16.mxu0 0
      %901 = vmatpush1.bf16.msra.mxu0 0
      %902 = vmatprep.subr.bf16.mxu0 0
      %903 = vmatpush1.bf16.msra.mxu0 0
      %904 = vmatprep.subr.bf16.mxu0 0
      %905 = vmatpush1.bf16.msra.mxu0 0
      %906 = vmatprep.subr.bf16.mxu0 0
      %907 = vmatpush1.bf16.msra.mxu0 0
      %908 = vmatprep.subr.bf16.mxu0 0
      %909 = vmatpush1.bf16.msra.mxu0 0
      %910 = vmatprep.subr.bf16.mxu0 0
      %911 = vmatpush1.bf16.msra.mxu0 0
      %912 = vmatprep.subr.bf16.mxu0 0
      %913 = vmatpush1.bf16.msra.mxu0 0
      %914 = vmatprep.subr.bf16.mxu0 0
      %915 = vmatpush1.bf16.msra.mxu0 0
      %916 = vmatprep.subr.bf16.mxu0 0
      %917 = vmatpush1.bf16.msra.mxu0 0
      %918 = vmatprep.subr.bf16.mxu0 0
      %919 = vmatpush1.bf16.msra.mxu0 0
      %920 = vmatprep.subr.bf16.mxu0 0
      %921 = vmatpush1.bf16.msra.mxu0 0
      %922 = vmatprep.mubr.bf16.mxu0 0
      %923 = vmatmul.mubr.bf16.gmra.mrb[0].mxu0 %v839
      %v924 = vpop.f32.mrb[0].mxu0
      %v925 = vadd.f32 %v631, %v924
      %v926 = vpop.f32.mrb[0].mxu0
      %v927 = vpop.f32.mrb[0].mxu0
      %v928 = vadd.f32 %v634, %v927
      %v929 = vpop.f32.mrb[0].mxu0
      %930 = vmatprep.mubr.bf16.mxu0 0
      %931 = vmatmul.mubr.bf16.gmra.mrb[0].mxu0 %v842
      %v932 = vpop.f32.mrb[0].mxu0
      %v933 = vadd.f32 %v639, %v932
      %v934 = vpop.f32.mrb[0].mxu0
      %v935 = vpop.f32.mrb[0].mxu0
      %v936 = vadd.f32 %v642, %v935
      %v937 = vpop.f32.mrb[0].mxu0
      %938 = vmatprep.mubr.bf16.mxu0 0
      %939 = vmatmul.mubr.bf16.gmra.mrb[0].mxu0 %v845
      %v940 = vpop.f32.mrb[0].mxu0
      %v941 = vadd.f32 %v647, %v940
      %v942 = vpop.f32.mrb[0].mxu0
      %v943 = vpop.f32.mrb[0].mxu0
      %v944 = vadd.f32 %v650, %v943
      %v945 = vpop.f32.mrb[0].mxu0
      %946 = vmatprep.mubr.bf16.mxu0 0
      %947 = vmatmul.mubr.bf16.gmra.mrb[0].mxu0 %v848
      %v948 = vpop.f32.mrb[0].mxu0
      %v949 = vadd.f32 %v655, %v948
      %v950 = vpop.f32.mrb[0].mxu0
      %v951 = vpop.f32.mrb[0].mxu0
      %v952 = vadd.f32 %v658, %v951
      %v953 = vpop.f32.mrb[0].mxu0
      %954 = vmatprep.mubr.bf16.mxu0 0
      %955 = vmatmul.mubr.bf16.gmra.mrb[0].mxu0 %v851
      %v956 = vpop.f32.mrb[0].mxu0
      %v957 = vadd.f32 %v663, %v956
      %v958 = vpop.f32.mrb[0].mxu0
      %v959 = vpop.f32.mrb[0].mxu0
      %v960 = vadd.f32 %v666, %v959
      %v961 = vpop.f32.mrb[0].mxu0
      %962 = vmatprep.mubr.bf16.mxu0 0
      %963 = vmatmul.mubr.bf16.gmra.mrb[0].mxu0 %v854
      %v964 = vpop.f32.mrb[0].mxu0
      %v965 = vadd.f32 %v671, %v964
      %v966 = vpop.f32.mrb[0].mxu0
      %v967 = vpop.f32.mrb[0].mxu0
      %v968 = vadd.f32 %v674, %v967
      %v969 = vpop.f32.mrb[0].mxu0
      %970 = vmatprep.mubr.bf16.mxu0 0
      %971 = vmatmul.mubr.bf16.gmra.mrb[0].mxu0 %v857
      %v972 = vpop.f32.mrb[0].mxu0
      %v973 = vadd.f32 %v679, %v972
      %v974 = vpop.f32.mrb[0].mxu0
      %v975 = vpop.f32.mrb[0].mxu0
      %v976 = vadd.f32 %v682, %v975
      %v977 = vpop.f32.mrb[0].mxu0
      %978 = vmatprep.mubr.bf16.mxu0 0
      %979 = vmatmul.mubr.bf16.gmra.mrb[0].mxu0 %v860
      %v980 = vpop.f32.mrb[0].mxu0
      %v981 = vadd.f32 %v687, %v980
      %v982 = vpop.f32.mrb[0].mxu0
      %v983 = vpop.f32.mrb[0].mxu0
      %v984 = vadd.f32 %v690, %v983
      %v985 = vpop.f32.mrb[0].mxu0
      %986 = vmatprep.mubr.bf16.mxu0 0
      %987 = vmatmul.mubr.bf16.gmra.mrb[0].mxu0 %v863
      %v988 = vpop.f32.mrb[0].mxu0
      %v989 = vadd.f32 %v695, %v988
      %v990 = vpop.f32.mrb[0].mxu0
      %v991 = vpop.f32.mrb[0].mxu0
      %v992 = vadd.f32 %v698, %v991
      %v993 = vpop.f32.mrb[0].mxu0
      %994 = vmatprep.mubr.bf16.mxu0 0
      %995 = vmatmul.mubr.bf16.gmra.mrb[0].mxu0 %v866
      %v996 = vpop.f32.mrb[0].mxu0
      %v997 = vadd.f32 %v703, %v996
      %v998 = vpop.f32.mrb[0].mxu0
      %v999 = vpop.f32.mrb[0].mxu0
      %v1000 = vadd.f32 %v706, %v999
      %v1001 = vpop.f32.mrb[0].mxu0
      %1002 = vmatprep.mubr.bf16.mxu0 0
      %1003 = vmatmul.mubr.bf16.gmra.mrb[0].mxu0 %v869
      %v1004 = vpop.f32.mrb[0].mxu0
      %v1005 = vadd.f32 %v711, %v1004
      %v1006 = vpop.f32.mrb[0].mxu0
      %v1007 = vpop.f32.mrb[0].mxu0
      %v1008 = vadd.f32 %v714, %v1007
      %v1009 = vpop.f32.mrb[0].mxu0
      %1010 = vmatprep.mubr.bf16.mxu0 0
      %1011 = vmatmul.mubr.bf16.gmra.mrb[0].mxu0 %v872
      %v1012 = vpop.f32.mrb[0].mxu0
      %v1013 = vadd.f32 %v719, %v1012
      %v1014 = vpop.f32.mrb[0].mxu0
      %v1015 = vpop.f32.mrb[0].mxu0
      %v1016 = vadd.f32 %v722, %v1015
      %v1017 = vpop.f32.mrb[0].mxu0
      %1018 = vmatprep.mubr.bf16.mxu0 0
      %1019 = vmatmul.mubr.bf16.gmra.mrb[0].mxu0 %v875
      %v1020 = vpop.f32.mrb[0].mxu0
      %v1021 = vadd.f32 %v727, %v1020
      %v1022 = vpop.f32.mrb[0].mxu0
      %v1023 = vpop.f32.mrb[0].mxu0
      %v1024 = vadd.f32 %v730, %v1023
      %v1025 = vpop.f32.mrb[0].mxu0
      %1026 = vmatprep.mubr.bf16.mxu0 0
      %1027 = vmatmul.mubr.bf16.gmra.mrb[0].mxu0 %v878
      %v1028 = vpop.f32.mrb[0].mxu0
      %v1029 = vadd.f32 %v735, %v1028
      %v1030 = vpop.f32.mrb[0].mxu0
      %v1031 = vpop.f32.mrb[0].mxu0
      %v1032 = vadd.f32 %v738, %v1031
      %v1033 = vpop.f32.mrb[0].mxu0
      %1034 = vmatprep.mubr.bf16.mxu0 0
      %1035 = vmatmul.mubr.bf16.gmra.mrb[0].mxu0 %v881
      %v1036 = vpop.f32.mrb[0].mxu0
      %v1037 = vadd.f32 %v743, %v1036
      %v1038 = vpop.f32.mrb[0].mxu0
      %v1039 = vpop.f32.mrb[0].mxu0
      %v1040 = vadd.f32 %v746, %v1039
      %v1041 = vpop.f32.mrb[0].mxu0
      %1042 = vmatprep.mubr.bf16.mxu0 0
      %1043 = vmatmul.mubr.bf16.gmra.mrb[0].mxu0 %v884
      %v1044 = vpop.f32.mrb[0].mxu0
      %v1045 = vadd.f32 %v751, %v1044
      %v1046 = vpop.f32.mrb[0].mxu0
      %v1047 = vpop.f32.mrb[0].mxu0
      %v1048 = vadd.f32 %v754, %v1047
      %v1049 = vpop.f32.mrb[0].mxu0
      %1050 = vdwg.mxu0
      %v1051 = vld [vmem:[%s4] sm:$0x1]
      %v1053 = vlaneseq
      %v1054 = vshrl.u32 %v1053, 7
      %v1055 = vsub.s32 0, %v1054
      %v1056 = vrot.slane %v1051, %v1055
      %v1058 = vadd.f32 %v925, %v1056
      %v1059 = vadd.f32 %v928, %v1056
      %v1060 = vadd.f32 %v933, %v1056
      %v1061 = vadd.f32 %v936, %v1056
      %v1062 = vadd.f32 %v941, %v1056
      %v1063 = vadd.f32 %v944, %v1056
      %v1064 = vadd.f32 %v949, %v1056
      %v1065 = vadd.f32 %v952, %v1056
      %v1066 = vadd.f32 %v957, %v1056
      %v1067 = vadd.f32 %v960, %v1056
      %v1068 = vadd.f32 %v965, %v1056
      %v1069 = vadd.f32 %v968, %v1056
      %v1070 = vadd.f32 %v973, %v1056
      %v1071 = vadd.f32 %v976, %v1056
      %v1072 = vadd.f32 %v981, %v1056
      %v1073 = vadd.f32 %v984, %v1056
      %v1074 = vadd.f32 %v989, %v1056
      %v1075 = vadd.f32 %v992, %v1056
      %v1076 = vadd.f32 %v997, %v1056
      %v1077 = vadd.f32 %v1000, %v1056
      %v1078 = vadd.f32 %v1005, %v1056
      %v1079 = vadd.f32 %v1008, %v1056
      %v1080 = vadd.f32 %v1013, %v1056
      %v1081 = vadd.f32 %v1016, %v1056
      %v1082 = vadd.f32 %v1021, %v1056
      %v1083 = vadd.f32 %v1024, %v1056
      %v1084 = vadd.f32 %v1029, %v1056
      %v1085 = vadd.f32 %v1032, %v1056
      %v1086 = vadd.f32 %v1037, %v1056
      %v1087 = vadd.f32 %v1040, %v1056
      %v1088 = vadd.f32 %v1045, %v1056
      %v1089 = vadd.f32 %v1048, %v1056
      %v1090 = vmax.f32 %v1058, 0.0
      %v1091 = vmax.f32 %v1059, 0.0
      %v1092 = vmax.f32 %v1060, 0.0
      %v1093 = vmax.f32 %v1061, 0.0
      %v1094 = vmax.f32 %v1062, 0.0
      %v1095 = vmax.f32 %v1063, 0.0
      %v1096 = vmax.f32 %v1064, 0.0
      %v1097 = vmax.f32 %v1065, 0.0
      %v1098 = vmax.f32 %v1066, 0.0
      %v1099 = vmax.f32 %v1067, 0.0
      %v1100 = vmax.f32 %v1068, 0.0
      %v1101 = vmax.f32 %v1069, 0.0
      %v1102 = vmax.f32 %v1070, 0.0
      %v1103 = vmax.f32 %v1071, 0.0
      %v1104 = vmax.f32 %v1072, 0.0
      %v1105 = vmax.f32 %v1073, 0.0
      %v1106 = vmax.f32 %v1074, 0.0
      %v1107 = vmax.f32 %v1075, 0.0
      %v1108 = vmax.f32 %v1076, 0.0
      %v1109 = vmax.f32 %v1077, 0.0
      %v1110 = vmax.f32 %v1078, 0.0
      %v1111 = vmax.f32 %v1079, 0.0
      %v1112 = vmax.f32 %v1080, 0.0
      %v1113 = vmax.f32 %v1081, 0.0
      %v1114 = vmax.f32 %v1082, 0.0
      %v1115 = vmax.f32 %v1083, 0.0
      %v1116 = vmax.f32 %v1084, 0.0
      %v1117 = vmax.f32 %v1085, 0.0
      %v1118 = vmax.f32 %v1086, 0.0
      %v1119 = vmax.f32 %v1087, 0.0
      %v1120 = vmax.f32 %v1088, 0.0
      %v1121 = vmax.f32 %v1089, 0.0
      %v1122 = vpack.c.bf16 %v1091, %v1090
      %v1123 = vpack.c.bf16 %v1093, %v1092
      %v1124 = vpack.c.bf16 %v1095, %v1094
      %v1125 = vpack.c.bf16 %v1097, %v1096
      %v1126 = vpack.c.bf16 %v1099, %v1098
      %v1127 = vpack.c.bf16 %v1101, %v1100
      %v1128 = vpack.c.bf16 %v1103, %v1102
      %v1129 = vpack.c.bf16 %v1105, %v1104
      %v1130 = vpack.c.bf16 %v1107, %v1106
      %v1131 = vpack.c.bf16 %v1109, %v1108
      %v1132 = vpack.c.bf16 %v1111, %v1110
      %v1133 = vpack.c.bf16 %v1113, %v1112
      %v1134 = vpack.c.bf16 %v1115, %v1114
      %v1135 = vpack.c.bf16 %v1117, %v1116
      %v1136 = vpack.c.bf16 %v1119, %v1118
      %v1137 = vpack.c.bf16 %v1121, %v1120
      %v1138 = vld [vmem:[%s5] sm:$0xf]
      %v1139 = vld [vmem:[%s5 + $0x4] sm:$0xf]
      %v1140 = vld [vmem:[%s5 + $0x8] sm:$0xf]
      %v1141 = vld [vmem:[%s5 + $0xc] sm:$0xf]
      %v1142 = vld [vmem:[%s5 + $0x10] sm:$0xf]
      %v1143 = vld [vmem:[%s5 + $0x14] sm:$0xf]
      %v1144 = vld [vmem:[%s5 + $0x18] sm:$0xf]
      %v1145 = vld [vmem:[%s5 + $0x1c] sm:$0xf]
      %v1146 = vld [vmem:[%s6] sm:$0x1]
      %v1148 = vlaneseq
      %v1149 = vshrl.u32 %v1148, 7
      %v1150 = vsub.s32 0, %v1149
      %v1151 = vrot.slane %v1146, %v1150
      %v1161 = vunpack.c.l.b16 %v1138
      %v1162 = vunpack.c.l.b16 %v1139
      %v1163 = vunpack.c.l.b16 %v1140
      %v1164 = vunpack.c.l.b16 %v1141
      %v1165 = vunpack.c.l.b16 %v1142
      %v1166 = vunpack.c.l.b16 %v1143
      %v1167 = vunpack.c.l.b16 %v1144
      %v1168 = vunpack.c.l.b16 %v1145
      %v1169 = vpack.c.b16 %v1162, %v1161
      %v1170 = vpack.c.b16 %v1164, %v1163
      %v1171 = vpack.c.b16 %v1166, %v1165
      %v1172 = vpack.c.b16 %v1168, %v1167
      %vm1177 = vcmask 523264
      %v1179 = vsel %vm1177, %v1122, 0
      %v1182 = vsel %vm1177, %v1123, 0
      %v1185 = vsel %vm1177, %v1124, 0
      %v1188 = vsel %vm1177, %v1125, 0
      %v1191 = vsel %vm1177, %v1126, 0
      %v1194 = vsel %vm1177, %v1127, 0
      %v1197 = vsel %vm1177, %v1128, 0
      %v1200 = vsel %vm1177, %v1129, 0
      %v1203 = vsel %vm1177, %v1130, 0
      %v1206 = vsel %vm1177, %v1131, 0
      %v1209 = vsel %vm1177, %v1132, 0
      %v1212 = vsel %vm1177, %v1133, 0
      %v1215 = vsel %vm1177, %v1134, 0
      %v1218 = vsel %vm1177, %v1135, 0
      %v1221 = vsel %vm1177, %v1136, 0
      %v1224 = vsel %vm1177, %v1137, 0
      %1226 = vmatprep.subr.bf16.mxu0 0
      %1227 = vmatpush1.bf16.msra.mxu0 %v1169
      %1228 = vmatprep.subr.bf16.mxu0 0
      %1229 = vmatpush1.bf16.msra.mxu0 %v1170
      %1230 = vmatprep.subr.bf16.mxu0 0
      %1231 = vmatpush1.bf16.msra.mxu0 %v1171
      %1232 = vmatprep.subr.bf16.mxu0 0
      %1233 = vmatpush1.bf16.msra.mxu0 %v1172
      %1234 = vmatprep.subr.bf16.mxu0 0
      %1235 = vmatpush1.bf16.msra.mxu0 0
      %1236 = vmatprep.subr.bf16.mxu0 0
      %1237 = vmatpush1.bf16.msra.mxu0 0
      %1238 = vmatprep.subr.bf16.mxu0 0
      %1239 = vmatpush1.bf16.msra.mxu0 0
      %1240 = vmatprep.subr.bf16.mxu0 0
      %1241 = vmatpush1.bf16.msra.mxu0 0
      %1242 = vmatprep.subr.bf16.mxu0 0
      %1243 = vmatpush1.bf16.msra.mxu0 0
      %1244 = vmatprep.subr.bf16.mxu0 0
      %1245 = vmatpush1.bf16.msra.mxu0 0
      %1246 = vmatprep.subr.bf16.mxu0 0
      %1247 = vmatpush1.bf16.msra.mxu0 0
      %1248 = vmatprep.subr.bf16.mxu0 0
      %1249 = vmatpush1.bf16.msra.mxu0 0
      %1250 = vmatprep.subr.bf16.mxu0 0
      %1251 = vmatpush1.bf16.msra.mxu0 0
      %1252 = vmatprep.subr.bf16.mxu0 0
      %1253 = vmatpush1.bf16.msra.mxu0 0
      %1254 = vmatprep.subr.bf16.mxu0 0
      %1255 = vmatpush1.bf16.msra.mxu0 0
      %1256 = vmatprep.subr.bf16.mxu0 0
      %1257 = vmatpush1.bf16.msra.mxu0 0
      %1258 = vmatprep.mubr.bf16.mxu0 0
      %1259 = vmatmul.mubr.bf16.gmra.mrb[0].mxu0 %v1179
      %v1260 = vpop.f32.mrb[0].mxu0
      %v1261 = vadd.f32 %v1151, %v1260
      %v1262 = vpop.f32.mrb[0].mxu0
      %v1263 = vpop.f32.mrb[0].mxu0
      %v1264 = vadd.f32 %v1151, %v1263
      %v1265 = vpop.f32.mrb[0].mxu0
      %1266 = vmatprep.mubr.bf16.mxu0 0
      %1267 = vmatmul.mubr.bf16.gmra.mrb[0].mxu0 %v1182
      %v1268 = vpop.f32.mrb[0].mxu0
      %v1269 = vadd.f32 %v1151, %v1268
      %v1270 = vpop.f32.mrb[0].mxu0
      %v1271 = vpop.f32.mrb[0].mxu0
      %v1272 = vadd.f32 %v1151, %v1271
      %v1273 = vpop.f32.mrb[0].mxu0
      %1274 = vmatprep.mubr.bf16.mxu0 0
      %1275 = vmatmul.mubr.bf16.gmra.mrb[0].mxu0 %v1185
      %v1276 = vpop.f32.mrb[0].mxu0
      %v1277 = vadd.f32 %v1151, %v1276
      %v1278 = vpop.f32.mrb[0].mxu0
      %v1279 = vpop.f32.mrb[0].mxu0
      %v1280 = vadd.f32 %v1151, %v1279
      %v1281 = vpop.f32.mrb[0].mxu0
      %1282 = vmatprep.mubr.bf16.mxu0 0
      %1283 = vmatmul.mubr.bf16.gmra.mrb[0].mxu0 %v1188
      %v1284 = vpop.f32.mrb[0].mxu0
      %v1285 = vadd.f32 %v1151, %v1284
      %v1286 = vpop.f32.mrb[0].mxu0
      %v1287 = vpop.f32.mrb[0].mxu0
      %v1288 = vadd.f32 %v1151, %v1287
      %v1289 = vpop.f32.mrb[0].mxu0
      %1290 = vmatprep.mubr.bf16.mxu0 0
      %1291 = vmatmul.mubr.bf16.gmra.mrb[0].mxu0 %v1191
      %v1292 = vpop.f32.mrb[0].mxu0
      %v1293 = vadd.f32 %v1151, %v1292
      %v1294 = vpop.f32.mrb[0].mxu0
      %v1295 = vpop.f32.mrb[0].mxu0
      %v1296 = vadd.f32 %v1151, %v1295
      %v1297 = vpop.f32.mrb[0].mxu0
      %1298 = vmatprep.mubr.bf16.mxu0 0
      %1299 = vmatmul.mubr.bf16.gmra.mrb[0].mxu0 %v1194
      %v1300 = vpop.f32.mrb[0].mxu0
      %v1301 = vadd.f32 %v1151, %v1300
      %v1302 = vpop.f32.mrb[0].mxu0
      %v1303 = vpop.f32.mrb[0].mxu0
      %v1304 = vadd.f32 %v1151, %v1303
      %v1305 = vpop.f32.mrb[0].mxu0
      %1306 = vmatprep.mubr.bf16.mxu0 0
      %1307 = vmatmul.mubr.bf16.gmra.mrb[0].mxu0 %v1197
      %v1308 = vpop.f32.mrb[0].mxu0
      %v1309 = vadd.f32 %v1151, %v1308
      %v1310 = vpop.f32.mrb[0].mxu0
      %v1311 = vpop.f32.mrb[0].mxu0
      %v1312 = vadd.f32 %v1151, %v1311
      %v1313 = vpop.f32.mrb[0].mxu0
      %1314 = vmatprep.mubr.bf16.mxu0 0
      %1315 = vmatmul.mubr.bf16.gmra.mrb[0].mxu0 %v1200
      %v1316 = vpop.f32.mrb[0].mxu0
      %v1317 = vadd.f32 %v1151, %v1316
      %v1318 = vpop.f32.mrb[0].mxu0
      %v1319 = vpop.f32.mrb[0].mxu0
      %v1320 = vadd.f32 %v1151, %v1319
      %v1321 = vpop.f32.mrb[0].mxu0
      %1322 = vmatprep.mubr.bf16.mxu0 0
      %1323 = vmatmul.mubr.bf16.gmra.mrb[0].mxu0 %v1203
      %v1324 = vpop.f32.mrb[0].mxu0
      %v1325 = vadd.f32 %v1151, %v1324
      %v1326 = vpop.f32.mrb[0].mxu0
      %v1327 = vpop.f32.mrb[0].mxu0
      %v1328 = vadd.f32 %v1151, %v1327
      %v1329 = vpop.f32.mrb[0].mxu0
      %1330 = vmatprep.mubr.bf16.mxu0 0
      %1331 = vmatmul.mubr.bf16.gmra.mrb[0].mxu0 %v1206
      %v1332 = vpop.f32.mrb[0].mxu0
      %v1333 = vadd.f32 %v1151, %v1332
      %v1334 = vpop.f32.mrb[0].mxu0
      %v1335 = vpop.f32.mrb[0].mxu0
      %v1336 = vadd.f32 %v1151, %v1335
      %v1337 = vpop.f32.mrb[0].mxu0
      %1338 = vmatprep.mubr.bf16.mxu0 0
      %1339 = vmatmul.mubr.bf16.gmra.mrb[0].mxu0 %v1209
      %v1340 = vpop.f32.mrb[0].mxu0
      %v1341 = vadd.f32 %v1151, %v1340
      %v1342 = vpop.f32.mrb[0].mxu0
      %v1343 = vpop.f32.mrb[0].mxu0
      %v1344 = vadd.f32 %v1151, %v1343
      %v1345 = vpop.f32.mrb[0].mxu0
      %1346 = vmatprep.mubr.bf16.mxu0 0
      %1347 = vmatmul.mubr.bf16.gmra.mrb[0].mxu0 %v1212
      %v1348 = vpop.f32.mrb[0].mxu0
      %v1349 = vadd.f32 %v1151, %v1348
      %v1350 = vpop.f32.mrb[0].mxu0
      %v1351 = vpop.f32.mrb[0].mxu0
      %v1352 = vadd.f32 %v1151, %v1351
      %v1353 = vpop.f32.mrb[0].mxu0
      %1354 = vmatprep.mubr.bf16.mxu0 0
      %1355 = vmatmul.mubr.bf16.gmra.mrb[0].mxu0 %v1215
      %v1356 = vpop.f32.mrb[0].mxu0
      %v1357 = vadd.f32 %v1151, %v1356
      %v1358 = vpop.f32.mrb[0].mxu0
      %v1359 = vpop.f32.mrb[0].mxu0
      %v1360 = vadd.f32 %v1151, %v1359
      %v1361 = vpop.f32.mrb[0].mxu0
      %1362 = vmatprep.mubr.bf16.mxu0 0
      %1363 = vmatmul.mubr.bf16.gmra.mrb[0].mxu0 %v1218
      %v1364 = vpop.f32.mrb[0].mxu0
      %v1365 = vadd.f32 %v1151, %v1364
      %v1366 = vpop.f32.mrb[0].mxu0
      %v1367 = vpop.f32.mrb[0].mxu0
      %v1368 = vadd.f32 %v1151, %v1367
      %v1369 = vpop.f32.mrb[0].mxu0
      %1370 = vmatprep.mubr.bf16.mxu0 0
      %1371 = vmatmul.mubr.bf16.gmra.mrb[0].mxu0 %v1221
      %v1372 = vpop.f32.mrb[0].mxu0
      %v1373 = vadd.f32 %v1151, %v1372
      %v1374 = vpop.f32.mrb[0].mxu0
      %v1375 = vpop.f32.mrb[0].mxu0
      %v1376 = vadd.f32 %v1151, %v1375
      %v1377 = vpop.f32.mrb[0].mxu0
      %1378 = vmatprep.mubr.bf16.mxu0 0
      %1379 = vmatmul.mubr.bf16.gmra.mrb[0].mxu0 %v1224
      %v1380 = vpop.f32.mrb[0].mxu0
      %v1381 = vadd.f32 %v1151, %v1380
      %v1382 = vpop.f32.mrb[0].mxu0
      %v1383 = vpop.f32.mrb[0].mxu0
      %v1384 = vadd.f32 %v1151, %v1383
      %v1385 = vpop.f32.mrb[0].mxu0
      %1386 = vdwg.mxu0
      %v1387 = vmax.f32 %v1261, 0.0
      %v1388 = vmax.f32 %v1264, 0.0
      %v1389 = vmax.f32 %v1269, 0.0
      %v1390 = vmax.f32 %v1272, 0.0
      %v1391 = vmax.f32 %v1277, 0.0
      %v1392 = vmax.f32 %v1280, 0.0
      %v1393 = vmax.f32 %v1285, 0.0
      %v1394 = vmax.f32 %v1288, 0.0
      %v1395 = vmax.f32 %v1293, 0.0
      %v1396 = vmax.f32 %v1296, 0.0
      %v1397 = vmax.f32 %v1301, 0.0
      %v1398 = vmax.f32 %v1304, 0.0
      %v1399 = vmax.f32 %v1309, 0.0
      %v1400 = vmax.f32 %v1312, 0.0
      %v1401 = vmax.f32 %v1317, 0.0
      %v1402 = vmax.f32 %v1320, 0.0
      %v1403 = vmax.f32 %v1325, 0.0
      %v1404 = vmax.f32 %v1328, 0.0
      %v1405 = vmax.f32 %v1333, 0.0
      %v1406 = vmax.f32 %v1336, 0.0
      %v1407 = vmax.f32 %v1341, 0.0
      %v1408 = vmax.f32 %v1344, 0.0
      %v1409 = vmax.f32 %v1349, 0.0
      %v1410 = vmax.f32 %v1352, 0.0
      %v1411 = vmax.f32 %v1357, 0.0
      %v1412 = vmax.f32 %v1360, 0.0
      %v1413 = vmax.f32 %v1365, 0.0
      %v1414 = vmax.f32 %v1368, 0.0
      %v1415 = vmax.f32 %v1373, 0.0
      %v1416 = vmax.f32 %v1376, 0.0
      %v1417 = vmax.f32 %v1381, 0.0
      %v1418 = vmax.f32 %v1384, 0.0
      %v1419 = vpack.c.bf16 %v1388, %v1387
      %v1420 = vpack.c.bf16 %v1390, %v1389
      %v1421 = vpack.c.bf16 %v1392, %v1391
      %v1422 = vpack.c.bf16 %v1394, %v1393
      %v1423 = vpack.c.bf16 %v1396, %v1395
      %v1424 = vpack.c.bf16 %v1398, %v1397
      %v1425 = vpack.c.bf16 %v1400, %v1399
      %v1426 = vpack.c.bf16 %v1402, %v1401
      %v1427 = vpack.c.bf16 %v1404, %v1403
      %v1428 = vpack.c.bf16 %v1406, %v1405
      %v1429 = vpack.c.bf16 %v1408, %v1407
      %v1430 = vpack.c.bf16 %v1410, %v1409
      %v1431 = vpack.c.bf16 %v1412, %v1411
      %v1432 = vpack.c.bf16 %v1414, %v1413
      %v1433 = vpack.c.bf16 %v1416, %v1415
      %v1434 = vpack.c.bf16 %v1418, %v1417
      %1451 = vrot.lane.b32.xlu0 %v1122, 64
      %v1452 = vpop.permute.xlu0 %1451
      %1453 = vrot.lane.b32.xlu0 %v1123, 64
      %v1454 = vpop.permute.xlu0 %1453
      %1455 = vrot.lane.b32.xlu0 %v1124, 64
      %v1456 = vpop.permute.xlu0 %1455
      %1457 = vrot.lane.b32.xlu0 %v1125, 64
      %v1458 = vpop.permute.xlu0 %1457
      %1459 = vrot.lane.b32.xlu0 %v1126, 64
      %v1460 = vpop.permute.xlu0 %1459
      %1461 = vrot.lane.b32.xlu0 %v1127, 64
      %v1462 = vpop.permute.xlu0 %1461
      %1463 = vrot.lane.b32.xlu0 %v1128, 64
      %v1464 = vpop.permute.xlu0 %1463
      %1465 = vrot.lane.b32.xlu0 %v1129, 64
      %v1466 = vpop.permute.xlu0 %1465
      %1467 = vrot.lane.b32.xlu0 %v1130, 64
      %v1468 = vpop.permute.xlu0 %1467
      %1469 = vrot.lane.b32.xlu0 %v1131, 64
      %v1470 = vpop.permute.xlu0 %1469
      %1471 = vrot.lane.b32.xlu0 %v1132, 64
      %v1472 = vpop.permute.xlu0 %1471
      %1473 = vrot.lane.b32.xlu0 %v1133, 64
      %v1474 = vpop.permute.xlu0 %1473
      %1475 = vrot.lane.b32.xlu0 %v1134, 64
      %v1476 = vpop.permute.xlu0 %1475
      %1477 = vrot.lane.b32.xlu0 %v1135, 64
      %v1478 = vpop.permute.xlu0 %1477
      %1479 = vrot.lane.b32.xlu0 %v1136, 64
      %v1480 = vpop.permute.xlu0 %1479
      %1481 = vrot.lane.b32.xlu0 %v1137, 64
      %v1482 = vpop.permute.xlu0 %1481
      %v1485 = vsel %vm1177, %v1419, %v1452
      %v1489 = vsel %vm1177, %v1420, %v1454
      %v1493 = vsel %vm1177, %v1421, %v1456
      %v1497 = vsel %vm1177, %v1422, %v1458
      %v1501 = vsel %vm1177, %v1423, %v1460
      %v1505 = vsel %vm1177, %v1424, %v1462
      %v1509 = vsel %vm1177, %v1425, %v1464
      %v1513 = vsel %vm1177, %v1426, %v1466
      %v1517 = vsel %vm1177, %v1427, %v1468
      %v1521 = vsel %vm1177, %v1428, %v1470
      %v1525 = vsel %vm1177, %v1429, %v1472
      %v1529 = vsel %vm1177, %v1430, %v1474
      %v1533 = vsel %vm1177, %v1431, %v1476
      %v1537 = vsel %vm1177, %v1432, %v1478
      %v1541 = vsel %vm1177, %v1433, %v1480
      %v1545 = vsel %vm1177, %v1434, %v1482
      %v1547 = vld [vmem:[%s7] sm:$0xf]
      %v1548 = vld [vmem:[%s7 + $0x4] sm:$0xf]
      %v1549 = vld [vmem:[%s7 + $0x8] sm:$0xf]
      %v1550 = vld [vmem:[%s7 + $0xc] sm:$0xf]
      %v1551 = vld [vmem:[%s7 + $0x10] sm:$0xf]
      %v1552 = vld [vmem:[%s7 + $0x14] sm:$0xf]
      %v1553 = vld [vmem:[%s7 + $0x18] sm:$0xf]
      %v1554 = vld [vmem:[%s7 + $0x1c] sm:$0xf]
      %v1555 = vld [vmem:[%s7 + $0x20] sm:$0xf]
      %v1556 = vld [vmem:[%s7 + $0x24] sm:$0xf]
      %v1557 = vld [vmem:[%s7 + $0x28] sm:$0xf]
      %v1558 = vld [vmem:[%s7 + $0x2c] sm:$0xf]
      %v1559 = vld [vmem:[%s7 + $0x30] sm:$0xf]
      %v1560 = vld [vmem:[%s7 + $0x34] sm:$0xf]
      %v1561 = vld [vmem:[%s7 + $0x38] sm:$0xf]
      %v1562 = vld [vmem:[%s7 + $0x3c] sm:$0xf]
      %v1563 = vld [vmem:[%s8] sm:$0x1]
      %v1565 = vlaneseq
      %v1566 = vshrl.u32 %v1565, 7
      %v1567 = vsub.s32 0, %v1566
      %v1568 = vrot.slane %v1563, %v1567
      %v1586 = vunpack.c.l.b16 %v1547
      %v1587 = vunpack.c.l.b16 %v1548
      %v1588 = vunpack.c.l.b16 %v1549
      %v1589 = vunpack.c.l.b16 %v1550
      %v1590 = vunpack.c.l.b16 %v1551
      %v1591 = vunpack.c.l.b16 %v1552
      %v1592 = vunpack.c.l.b16 %v1553
      %v1593 = vunpack.c.l.b16 %v1554
      %v1594 = vunpack.c.l.b16 %v1555
      %v1595 = vunpack.c.l.b16 %v1556
      %v1596 = vunpack.c.l.b16 %v1557
      %v1597 = vunpack.c.l.b16 %v1558
      %v1598 = vunpack.c.l.b16 %v1559
      %v1599 = vunpack.c.l.b16 %v1560
      %v1600 = vunpack.c.l.b16 %v1561
      %v1601 = vunpack.c.l.b16 %v1562
      %v1602 = vpack.c.b16 %v1587, %v1586
      %v1603 = vpack.c.b16 %v1589, %v1588
      %v1604 = vpack.c.b16 %v1591, %v1590
      %v1605 = vpack.c.b16 %v1593, %v1592
      %v1606 = vpack.c.b16 %v1595, %v1594
      %v1607 = vpack.c.b16 %v1597, %v1596
      %v1608 = vpack.c.b16 %v1599, %v1598
      %v1609 = vpack.c.b16 %v1601, %v1600
      %1618 = vmatprep.subr.bf16.mxu0 0
      %1619 = vmatpush1.bf16.msra.mxu0 %v1602
      %1620 = vmatprep.subr.bf16.mxu0 0
      %1621 = vmatpush1.bf16.msra.mxu0 %v1603
      %1622 = vmatprep.subr.bf16.mxu0 0
      %1623 = vmatpush1.bf16.msra.mxu0 %v1604
      %1624 = vmatprep.subr.bf16.mxu0 0
      %1625 = vmatpush1.bf16.msra.mxu0 %v1605
      %1626 = vmatprep.subr.bf16.mxu0 0
      %1627 = vmatpush1.bf16.msra.mxu0 %v1606
      %1628 = vmatprep.subr.bf16.mxu0 0
      %1629 = vmatpush1.bf16.msra.mxu0 %v1607
      %1630 = vmatprep.subr.bf16.mxu0 0
      %1631 = vmatpush1.bf16.msra.mxu0 %v1608
      %1632 = vmatprep.subr.bf16.mxu0 0
      %1633 = vmatpush1.bf16.msra.mxu0 %v1609
      %1634 = vmatprep.subr.bf16.mxu0 0
      %1635 = vmatpush1.bf16.msra.mxu0 0
      %1636 = vmatprep.subr.bf16.mxu0 0
      %1637 = vmatpush1.bf16.msra.mxu0 0
      %1638 = vmatprep.subr.bf16.mxu0 0
      %1639 = vmatpush1.bf16.msra.mxu0 0
      %1640 = vmatprep.subr.bf16.mxu0 0
      %1641 = vmatpush1.bf16.msra.mxu0 0
      %1642 = vmatprep.subr.bf16.mxu0 0
      %1643 = vmatpush1.bf16.msra.mxu0 0
      %1644 = vmatprep.subr.bf16.mxu0 0
      %1645 = vmatpush1.bf16.msra.mxu0 0
      %1646 = vmatprep.subr.bf16.mxu0 0
      %1647 = vmatpush1.bf16.msra.mxu0 0
      %1648 = vmatprep.subr.bf16.mxu0 0
      %1649 = vmatpush1.bf16.msra.mxu0 0
      %1650 = vmatprep.mubr.bf16.mxu0 0
      %1651 = vmatmul.mubr.bf16.gmra.mrb[0].mxu0 %v1485
      %v1652 = vpop.f32.mrb[0].mxu0
      %v1653 = vadd.f32 %v1568, %v1652
      %v1654 = vpop.f32.mrb[0].mxu0
      %v1655 = vpop.f32.mrb[0].mxu0
      %v1656 = vadd.f32 %v1568, %v1655
      %v1657 = vpop.f32.mrb[0].mxu0
      %1658 = vmatprep.mubr.bf16.mxu0 0
      %1659 = vmatmul.mubr.bf16.gmra.mrb[0].mxu0 %v1489
      %v1660 = vpop.f32.mrb[0].mxu0
      %v1661 = vadd.f32 %v1568, %v1660
      %v1662 = vpop.f32.mrb[0].mxu0
      %v1663 = vpop.f32.mrb[0].mxu0
      %v1664 = vadd.f32 %v1568, %v1663
      %v1665 = vpop.f32.mrb[0].mxu0
      %1666 = vmatprep.mubr.bf16.mxu0 0
      %1667 = vmatmul.mubr.bf16.gmra.mrb[0].mxu0 %v1493
      %v1668 = vpop.f32.mrb[0].mxu0
      %v1669 = vadd.f32 %v1568, %v1668
      %v1670 = vpop.f32.mrb[0].mxu0
      %v1671 = vpop.f32.mrb[0].mxu0
      %v1672 = vadd.f32 %v1568, %v1671
      %v1673 = vpop.f32.mrb[0].mxu0
      %1674 = vmatprep.mubr.bf16.mxu0 0
      %1675 = vmatmul.mubr.bf16.gmra.mrb[0].mxu0 %v1497
      %v1676 = vpop.f32.mrb[0].mxu0
      %v1677 = vadd.f32 %v1568, %v1676
      %v1678 = vpop.f32.mrb[0].mxu0
      %v1679 = vpop.f32.mrb[0].mxu0
      %v1680 = vadd.f32 %v1568, %v1679
      %v1681 = vpop.f32.mrb[0].mxu0
      %1682 = vmatprep.mubr.bf16.mxu0 0
      %1683 = vmatmul.mubr.bf16.gmra.mrb[0].mxu0 %v1501
      %v1684 = vpop.f32.mrb[0].mxu0
      %v1685 = vadd.f32 %v1568, %v1684
      %v1686 = vpop.f32.mrb[0].mxu0
      %v1687 = vpop.f32.mrb[0].mxu0
      %v1688 = vadd.f32 %v1568, %v1687
      %v1689 = vpop.f32.mrb[0].mxu0
      %1690 = vmatprep.mubr.bf16.mxu0 0
      %1691 = vmatmul.mubr.bf16.gmra.mrb[0].mxu0 %v1505
      %v1692 = vpop.f32.mrb[0].mxu0
      %v1693 = vadd.f32 %v1568, %v1692
      %v1694 = vpop.f32.mrb[0].mxu0
      %v1695 = vpop.f32.mrb[0].mxu0
      %v1696 = vadd.f32 %v1568, %v1695
      %v1697 = vpop.f32.mrb[0].mxu0
      %1698 = vmatprep.mubr.bf16.mxu0 0
      %1699 = vmatmul.mubr.bf16.gmra.mrb[0].mxu0 %v1509
      %v1700 = vpop.f32.mrb[0].mxu0
      %v1701 = vadd.f32 %v1568, %v1700
      %v1702 = vpop.f32.mrb[0].mxu0
      %v1703 = vpop.f32.mrb[0].mxu0
      %v1704 = vadd.f32 %v1568, %v1703
      %v1705 = vpop.f32.mrb[0].mxu0
      %1706 = vmatprep.mubr.bf16.mxu0 0
      %1707 = vmatmul.mubr.bf16.gmra.mrb[0].mxu0 %v1513
      %v1708 = vpop.f32.mrb[0].mxu0
      %v1709 = vadd.f32 %v1568, %v1708
      %v1710 = vpop.f32.mrb[0].mxu0
      %v1711 = vpop.f32.mrb[0].mxu0
      %v1712 = vadd.f32 %v1568, %v1711
      %v1713 = vpop.f32.mrb[0].mxu0
      %1714 = vmatprep.mubr.bf16.mxu0 0
      %1715 = vmatmul.mubr.bf16.gmra.mrb[0].mxu0 %v1517
      %v1716 = vpop.f32.mrb[0].mxu0
      %v1717 = vadd.f32 %v1568, %v1716
      %v1718 = vpop.f32.mrb[0].mxu0
      %v1719 = vpop.f32.mrb[0].mxu0
      %v1720 = vadd.f32 %v1568, %v1719
      %v1721 = vpop.f32.mrb[0].mxu0
      %1722 = vmatprep.mubr.bf16.mxu0 0
      %1723 = vmatmul.mubr.bf16.gmra.mrb[0].mxu0 %v1521
      %v1724 = vpop.f32.mrb[0].mxu0
      %v1725 = vadd.f32 %v1568, %v1724
      %v1726 = vpop.f32.mrb[0].mxu0
      %v1727 = vpop.f32.mrb[0].mxu0
      %v1728 = vadd.f32 %v1568, %v1727
      %v1729 = vpop.f32.mrb[0].mxu0
      %1730 = vmatprep.mubr.bf16.mxu0 0
      %1731 = vmatmul.mubr.bf16.gmra.mrb[0].mxu0 %v1525
      %v1732 = vpop.f32.mrb[0].mxu0
      %v1733 = vadd.f32 %v1568, %v1732
      %v1734 = vpop.f32.mrb[0].mxu0
      %v1735 = vpop.f32.mrb[0].mxu0
      %v1736 = vadd.f32 %v1568, %v1735
      %v1737 = vpop.f32.mrb[0].mxu0
      %1738 = vmatprep.mubr.bf16.mxu0 0
      %1739 = vmatmul.mubr.bf16.gmra.mrb[0].mxu0 %v1529
      %v1740 = vpop.f32.mrb[0].mxu0
      %v1741 = vadd.f32 %v1568, %v1740
      %v1742 = vpop.f32.mrb[0].mxu0
      %v1743 = vpop.f32.mrb[0].mxu0
      %v1744 = vadd.f32 %v1568, %v1743
      %v1745 = vpop.f32.mrb[0].mxu0
      %1746 = vmatprep.mubr.bf16.mxu0 0
      %1747 = vmatmul.mubr.bf16.gmra.mrb[0].mxu0 %v1533
      %v1748 = vpop.f32.mrb[0].mxu0
      %v1749 = vadd.f32 %v1568, %v1748
      %v1750 = vpop.f32.mrb[0].mxu0
      %v1751 = vpop.f32.mrb[0].mxu0
      %v1752 = vadd.f32 %v1568, %v1751
      %v1753 = vpop.f32.mrb[0].mxu0
      %1754 = vmatprep.mubr.bf16.mxu0 0
      %1755 = vmatmul.mubr.bf16.gmra.mrb[0].mxu0 %v1537
      %v1756 = vpop.f32.mrb[0].mxu0
      %v1757 = vadd.f32 %v1568, %v1756
      %v1758 = vpop.f32.mrb[0].mxu0
      %v1759 = vpop.f32.mrb[0].mxu0
      %v1760 = vadd.f32 %v1568, %v1759
      %v1761 = vpop.f32.mrb[0].mxu0
      %1762 = vmatprep.mubr.bf16.mxu0 0
      %1763 = vmatmul.mubr.bf16.gmra.mrb[0].mxu0 %v1541
      %v1764 = vpop.f32.mrb[0].mxu0
      %v1765 = vadd.f32 %v1568, %v1764
      %v1766 = vpop.f32.mrb[0].mxu0
      %v1767 = vpop.f32.mrb[0].mxu0
      %v1768 = vadd.f32 %v1568, %v1767
      %v1769 = vpop.f32.mrb[0].mxu0
      %1770 = vmatprep.mubr.bf16.mxu0 0
      %1771 = vmatmul.mubr.bf16.gmra.mrb[0].mxu0 %v1545
      %v1772 = vpop.f32.mrb[0].mxu0
      %v1773 = vadd.f32 %v1568, %v1772
      %v1774 = vpop.f32.mrb[0].mxu0
      %v1775 = vpop.f32.mrb[0].mxu0
      %v1776 = vadd.f32 %v1568, %v1775
      %v1777 = vpop.f32.mrb[0].mxu0
      %1778 = vdwg.mxu0
      %v1779 = vlaneseq
      %v1780 = vand.u32 %v1779, 127
      %vm1781 = vcmp.lt.s32.totalorder %v1780, 3
      %v1782 = vxor.u32 %v1653, 2147483648
      %v1783 = vxor.u32 %v1656, 2147483648
      %v1784 = vxor.u32 %v1661, 2147483648
      %v1785 = vxor.u32 %v1664, 2147483648
      %v1786 = vxor.u32 %v1669, 2147483648
      %v1787 = vxor.u32 %v1672, 2147483648
      %v1788 = vxor.u32 %v1677, 2147483648
      %v1789 = vxor.u32 %v1680, 2147483648
      %v1790 = vxor.u32 %v1685, 2147483648
      %v1791 = vxor.u32 %v1688, 2147483648
      %v1792 = vxor.u32 %v1693, 2147483648
      %v1793 = vxor.u32 %v1696, 2147483648
      %v1794 = vxor.u32 %v1701, 2147483648
      %v1795 = vxor.u32 %v1704, 2147483648
      %v1796 = vxor.u32 %v1709, 2147483648
      %v1797 = vxor.u32 %v1712, 2147483648
      %v1798 = vxor.u32 %v1717, 2147483648
      %v1799 = vxor.u32 %v1720, 2147483648
      %v1800 = vxor.u32 %v1725, 2147483648
      %v1801 = vxor.u32 %v1728, 2147483648
      %v1802 = vxor.u32 %v1733, 2147483648
      %v1803 = vxor.u32 %v1736, 2147483648
      %v1804 = vxor.u32 %v1741, 2147483648
      %v1805 = vxor.u32 %v1744, 2147483648
      %v1806 = vxor.u32 %v1749, 2147483648
      %v1807 = vxor.u32 %v1752, 2147483648
      %v1808 = vxor.u32 %v1757, 2147483648
      %v1809 = vxor.u32 %v1760, 2147483648
      %v1810 = vxor.u32 %v1765, 2147483648
      %v1811 = vxor.u32 %v1768, 2147483648
      %v1812 = vxor.u32 %v1773, 2147483648
      %v1813 = vxor.u32 %v1776, 2147483648
      %v1814 = vmul.f32 %v1782, 1.442695
      %v1815 = vpow.pop %v1814
      %v1816 = vmul.f32 %v1783, 1.442695
      %v1817 = vpow.pop %v1816
      %v1818 = vmul.f32 %v1784, 1.442695
      %v1819 = vpow.pop %v1818
      %v1820 = vmul.f32 %v1785, 1.442695
      %v1821 = vpow.pop %v1820
      %v1822 = vmul.f32 %v1786, 1.442695
      %v1823 = vpow.pop %v1822
      %v1824 = vmul.f32 %v1787, 1.442695
      %v1825 = vpow.pop %v1824
      %v1826 = vmul.f32 %v1788, 1.442695
      %v1827 = vpow.pop %v1826
      %v1828 = vmul.f32 %v1789, 1.442695
      %v1829 = vpow.pop %v1828
      %v1830 = vmul.f32 %v1790, 1.442695
      %v1831 = vpow.pop %v1830
      %v1832 = vmul.f32 %v1791, 1.442695
      %v1833 = vpow.pop %v1832
      %v1834 = vmul.f32 %v1792, 1.442695
      %v1835 = vpow.pop %v1834
      %v1836 = vmul.f32 %v1793, 1.442695
      %v1837 = vpow.pop %v1836
      %v1838 = vmul.f32 %v1794, 1.442695
      %v1839 = vpow.pop %v1838
      %v1840 = vmul.f32 %v1795, 1.442695
      %v1841 = vpow.pop %v1840
      %v1842 = vmul.f32 %v1796, 1.442695
      %v1843 = vpow.pop %v1842
      %v1844 = vmul.f32 %v1797, 1.442695
      %v1845 = vpow.pop %v1844
      %v1846 = vmul.f32 %v1798, 1.442695
      %v1847 = vpow.pop %v1846
      %v1848 = vmul.f32 %v1799, 1.442695
      %v1849 = vpow.pop %v1848
      %v1850 = vmul.f32 %v1800, 1.442695
      %v1851 = vpow.pop %v1850
      %v1852 = vmul.f32 %v1801, 1.442695
      %v1853 = vpow.pop %v1852
      %v1854 = vmul.f32 %v1802, 1.442695
      %v1855 = vpow.pop %v1854
      %v1856 = vmul.f32 %v1803, 1.442695
      %v1857 = vpow.pop %v1856
      %v1858 = vmul.f32 %v1804, 1.442695
      %v1859 = vpow.pop %v1858
      %v1860 = vmul.f32 %v1805, 1.442695
      %v1861 = vpow.pop %v1860
      %v1862 = vmul.f32 %v1806, 1.442695
      %v1863 = vpow.pop %v1862
      %v1864 = vmul.f32 %v1807, 1.442695
      %v1865 = vpow.pop %v1864
      %v1866 = vmul.f32 %v1808, 1.442695
      %v1867 = vpow.pop %v1866
      %v1868 = vmul.f32 %v1809, 1.442695
      %v1869 = vpow.pop %v1868
      %v1870 = vmul.f32 %v1810, 1.442695
      %v1871 = vpow.pop %v1870
      %v1872 = vmul.f32 %v1811, 1.442695
      %v1873 = vpow.pop %v1872
      %v1874 = vmul.f32 %v1812, 1.442695
      %v1875 = vpow.pop %v1874
      %v1876 = vmul.f32 %v1813, 1.442695
      %v1877 = vpow.pop %v1876
      %v1878 = vadd.f32 %v1815, 1.0
      %v1879 = vadd.f32 %v1817, 1.0
      %v1880 = vadd.f32 %v1819, 1.0
      %v1881 = vadd.f32 %v1821, 1.0
      %v1882 = vadd.f32 %v1823, 1.0
      %v1883 = vadd.f32 %v1825, 1.0
      %v1884 = vadd.f32 %v1827, 1.0
      %v1885 = vadd.f32 %v1829, 1.0
      %v1886 = vadd.f32 %v1831, 1.0
      %v1887 = vadd.f32 %v1833, 1.0
      %v1888 = vadd.f32 %v1835, 1.0
      %v1889 = vadd.f32 %v1837, 1.0
      %v1890 = vadd.f32 %v1839, 1.0
      %v1891 = vadd.f32 %v1841, 1.0
      %v1892 = vadd.f32 %v1843, 1.0
      %v1893 = vadd.f32 %v1845, 1.0
      %v1894 = vadd.f32 %v1847, 1.0
      %v1895 = vadd.f32 %v1849, 1.0
      %v1896 = vadd.f32 %v1851, 1.0
      %v1897 = vadd.f32 %v1853, 1.0
      %v1898 = vadd.f32 %v1855, 1.0
      %v1899 = vadd.f32 %v1857, 1.0
      %v1900 = vadd.f32 %v1859, 1.0
      %v1901 = vadd.f32 %v1861, 1.0
      %v1902 = vadd.f32 %v1863, 1.0
      %v1903 = vadd.f32 %v1865, 1.0
      %v1904 = vadd.f32 %v1867, 1.0
      %v1905 = vadd.f32 %v1869, 1.0
      %v1906 = vadd.f32 %v1871, 1.0
      %v1907 = vadd.f32 %v1873, 1.0
      %v1908 = vadd.f32 %v1875, 1.0
      %v1909 = vadd.f32 %v1877, 1.0
      %v1910 = vrcp.pop %v1878
      %v1911 = vmul.f32 1.0, %v1910
      %v1912 = vrcp.pop %v1879
      %v1913 = vmul.f32 1.0, %v1912
      %v1914 = vrcp.pop %v1880
      %v1915 = vmul.f32 1.0, %v1914
      %v1916 = vrcp.pop %v1881
      %v1917 = vmul.f32 1.0, %v1916
      %v1918 = vrcp.pop %v1882
      %v1919 = vmul.f32 1.0, %v1918
      %v1920 = vrcp.pop %v1883
      %v1921 = vmul.f32 1.0, %v1920
      %v1922 = vrcp.pop %v1884
      %v1923 = vmul.f32 1.0, %v1922
      %v1924 = vrcp.pop %v1885
      %v1925 = vmul.f32 1.0, %v1924
      %v1926 = vrcp.pop %v1886
      %v1927 = vmul.f32 1.0, %v1926
      %v1928 = vrcp.pop %v1887
      %v1929 = vmul.f32 1.0, %v1928
      %v1930 = vrcp.pop %v1888
      %v1931 = vmul.f32 1.0, %v1930
      %v1932 = vrcp.pop %v1889
      %v1933 = vmul.f32 1.0, %v1932
      %v1934 = vrcp.pop %v1890
      %v1935 = vmul.f32 1.0, %v1934
      %v1936 = vrcp.pop %v1891
      %v1937 = vmul.f32 1.0, %v1936
      %v1938 = vrcp.pop %v1892
      %v1939 = vmul.f32 1.0, %v1938
      %v1940 = vrcp.pop %v1893
      %v1941 = vmul.f32 1.0, %v1940
      %v1942 = vrcp.pop %v1894
      %v1943 = vmul.f32 1.0, %v1942
      %v1944 = vrcp.pop %v1895
      %v1945 = vmul.f32 1.0, %v1944
      %v1946 = vrcp.pop %v1896
      %v1947 = vmul.f32 1.0, %v1946
      %v1948 = vrcp.pop %v1897
      %v1949 = vmul.f32 1.0, %v1948
      %v1950 = vrcp.pop %v1898
      %v1951 = vmul.f32 1.0, %v1950
      %v1952 = vrcp.pop %v1899
      %v1953 = vmul.f32 1.0, %v1952
      %v1954 = vrcp.pop %v1900
      %v1955 = vmul.f32 1.0, %v1954
      %v1956 = vrcp.pop %v1901
      %v1957 = vmul.f32 1.0, %v1956
      %v1958 = vrcp.pop %v1902
      %v1959 = vmul.f32 1.0, %v1958
      %v1960 = vrcp.pop %v1903
      %v1961 = vmul.f32 1.0, %v1960
      %v1962 = vrcp.pop %v1904
      %v1963 = vmul.f32 1.0, %v1962
      %v1964 = vrcp.pop %v1905
      %v1965 = vmul.f32 1.0, %v1964
      %v1966 = vrcp.pop %v1906
      %v1967 = vmul.f32 1.0, %v1966
      %v1968 = vrcp.pop %v1907
      %v1969 = vmul.f32 1.0, %v1968
      %v1970 = vrcp.pop %v1908
      %v1971 = vmul.f32 1.0, %v1970
      %v1972 = vrcp.pop %v1909
      %v1973 = vmul.f32 1.0, %v1972
      %vm1974 = vcmp.gt.f32.partialorder %v1653, 20.0
      %vm1975 = vcmp.gt.f32.partialorder %v1656, 20.0
      %vm1976 = vcmp.gt.f32.partialorder %v1661, 20.0
      %vm1977 = vcmp.gt.f32.partialorder %v1664, 20.0
      %vm1978 = vcmp.gt.f32.partialorder %v1669, 20.0
      %vm1979 = vcmp.gt.f32.partialorder %v1672, 20.0
      %vm1980 = vcmp.gt.f32.partialorder %v1677, 20.0
      %vm1981 = vcmp.gt.f32.partialorder %v1680, 20.0
      %vm1982 = vcmp.gt.f32.partialorder %v1685, 20.0
      %vm1983 = vcmp.gt.f32.partialorder %v1688, 20.0
      %vm1984 = vcmp.gt.f32.partialorder %v1693, 20.0
      %vm1985 = vcmp.gt.f32.partialorder %v1696, 20.0
      %vm1986 = vcmp.gt.f32.partialorder %v1701, 20.0
      %vm1987 = vcmp.gt.f32.partialorder %v1704, 20.0
      %vm1988 = vcmp.gt.f32.partialorder %v1709, 20.0
      %vm1989 = vcmp.gt.f32.partialorder %v1712, 20.0
      %vm1990 = vcmp.gt.f32.partialorder %v1717, 20.0
      %vm1991 = vcmp.gt.f32.partialorder %v1720, 20.0
      %vm1992 = vcmp.gt.f32.partialorder %v1725, 20.0
      %vm1993 = vcmp.gt.f32.partialorder %v1728, 20.0
      %vm1994 = vcmp.gt.f32.partialorder %v1733, 20.0
      %vm1995 = vcmp.gt.f32.partialorder %v1736, 20.0
      %vm1996 = vcmp.gt.f32.partialorder %v1741, 20.0
      %vm1997 = vcmp.gt.f32.partialorder %v1744, 20.0
      %vm1998 = vcmp.gt.f32.partialorder %v1749, 20.0
      %vm1999 = vcmp.gt.f32.partialorder %v1752, 20.0
      %vm2000 = vcmp.gt.f32.partialorder %v1757, 20.0
      %vm2001 = vcmp.gt.f32.partialorder %v1760, 20.0
      %vm2002 = vcmp.gt.f32.partialorder %v1765, 20.0
      %vm2003 = vcmp.gt.f32.partialorder %v1768, 20.0
      %vm2004 = vcmp.gt.f32.partialorder %v1773, 20.0
      %vm2005 = vcmp.gt.f32.partialorder %v1776, 20.0
      %v2006 = vmin.f32 %v1653, 20.0
      %v2007 = vmin.f32 %v1656, 20.0
      %v2008 = vmin.f32 %v1661, 20.0
      %v2009 = vmin.f32 %v1664, 20.0
      %v2010 = vmin.f32 %v1669, 20.0
      %v2011 = vmin.f32 %v1672, 20.0
      %v2012 = vmin.f32 %v1677, 20.0
      %v2013 = vmin.f32 %v1680, 20.0
      %v2014 = vmin.f32 %v1685, 20.0
      %v2015 = vmin.f32 %v1688, 20.0
      %v2016 = vmin.f32 %v1693, 20.0
      %v2017 = vmin.f32 %v1696, 20.0
      %v2018 = vmin.f32 %v1701, 20.0
      %v2019 = vmin.f32 %v1704, 20.0
      %v2020 = vmin.f32 %v1709, 20.0
      %v2021 = vmin.f32 %v1712, 20.0
      %v2022 = vmin.f32 %v1717, 20.0
      %v2023 = vmin.f32 %v1720, 20.0
      %v2024 = vmin.f32 %v1725, 20.0
      %v2025 = vmin.f32 %v1728, 20.0
      %v2026 = vmin.f32 %v1733, 20.0
      %v2027 = vmin.f32 %v1736, 20.0
      %v2028 = vmin.f32 %v1741, 20.0
      %v2029 = vmin.f32 %v1744, 20.0
      %v2030 = vmin.f32 %v1749, 20.0
      %v2031 = vmin.f32 %v1752, 20.0
      %v2032 = vmin.f32 %v1757, 20.0
      %v2033 = vmin.f32 %v1760, 20.0
      %v2034 = vmin.f32 %v1765, 20.0
      %v2035 = vmin.f32 %v1768, 20.0
      %v2036 = vmin.f32 %v1773, 20.0
      %v2037 = vmin.f32 %v1776, 20.0
      %v2038 = vmul.f32 %v2006, 1.442695
      %v2039 = vpow.pop %v2038
      %v2040 = vmul.f32 %v2007, 1.442695
      %v2041 = vpow.pop %v2040
      %v2042 = vmul.f32 %v2008, 1.442695
      %v2043 = vpow.pop %v2042
      %v2044 = vmul.f32 %v2009, 1.442695
      %v2045 = vpow.pop %v2044
      %v2046 = vmul.f32 %v2010, 1.442695
      %v2047 = vpow.pop %v2046
      %v2048 = vmul.f32 %v2011, 1.442695
      %v2049 = vpow.pop %v2048
      %v2050 = vmul.f32 %v2012, 1.442695
      %v2051 = vpow.pop %v2050
      %v2052 = vmul.f32 %v2013, 1.442695
      %v2053 = vpow.pop %v2052
      %v2054 = vmul.f32 %v2014, 1.442695
      %v2055 = vpow.pop %v2054
      %v2056 = vmul.f32 %v2015, 1.442695
      %v2057 = vpow.pop %v2056
      %v2058 = vmul.f32 %v2016, 1.442695
      %v2059 = vpow.pop %v2058
      %v2060 = vmul.f32 %v2017, 1.442695
      %v2061 = vpow.pop %v2060
      %v2062 = vmul.f32 %v2018, 1.442695
      %v2063 = vpow.pop %v2062
      %v2064 = vmul.f32 %v2019, 1.442695
      %v2065 = vpow.pop %v2064
      %v2066 = vmul.f32 %v2020, 1.442695
      %v2067 = vpow.pop %v2066
      %v2068 = vmul.f32 %v2021, 1.442695
      %v2069 = vpow.pop %v2068
      %v2070 = vmul.f32 %v2022, 1.442695
      %v2071 = vpow.pop %v2070
      %v2072 = vmul.f32 %v2023, 1.442695
      %v2073 = vpow.pop %v2072
      %v2074 = vmul.f32 %v2024, 1.442695
      %v2075 = vpow.pop %v2074
      %v2076 = vmul.f32 %v2025, 1.442695
      %v2077 = vpow.pop %v2076
      %v2078 = vmul.f32 %v2026, 1.442695
      %v2079 = vpow.pop %v2078
      %v2080 = vmul.f32 %v2027, 1.442695
      %v2081 = vpow.pop %v2080
      %v2082 = vmul.f32 %v2028, 1.442695
      %v2083 = vpow.pop %v2082
      %v2084 = vmul.f32 %v2029, 1.442695
      %v2085 = vpow.pop %v2084
      %v2086 = vmul.f32 %v2030, 1.442695
      %v2087 = vpow.pop %v2086
      %v2088 = vmul.f32 %v2031, 1.442695
      %v2089 = vpow.pop %v2088
      %v2090 = vmul.f32 %v2032, 1.442695
      %v2091 = vpow.pop %v2090
      %v2092 = vmul.f32 %v2033, 1.442695
      %v2093 = vpow.pop %v2092
      %v2094 = vmul.f32 %v2034, 1.442695
      %v2095 = vpow.pop %v2094
      %v2096 = vmul.f32 %v2035, 1.442695
      %v2097 = vpow.pop %v2096
      %v2098 = vmul.f32 %v2036, 1.442695
      %v2099 = vpow.pop %v2098
      %v2100 = vmul.f32 %v2037, 1.442695
      %v2101 = vpow.pop %v2100
      %v2102 = vadd.f32 %v2039, 1.0
      %v2103 = vlog2.pop %v2102
      %v2104 = vmul.f32 %v2103, 0.6931472
      %v2105 = vmul.f32 -0.5, %v2039
      %v2106 = vadd.f32 %v2105, 1.0
      %v2107 = vmul.f32 %v2106, %v2039
      %v2108 = vand.u32 2147483647, %v2039
      %vm2109 = vcmp.lt.f32.partialorder %v2108, 0.0004427343
      %v2110 = vsel %vm2109, %v2107, %v2104
      %v2111 = vadd.f32 %v2041, 1.0
      %v2112 = vlog2.pop %v2111
      %v2113 = vmul.f32 %v2112, 0.6931472
      %v2114 = vmul.f32 -0.5, %v2041
      %v2115 = vadd.f32 %v2114, 1.0
      %v2116 = vmul.f32 %v2115, %v2041
      %v2117 = vand.u32 2147483647, %v2041
      %vm2118 = vcmp.lt.f32.partialorder %v2117, 0.0004427343
      %v2119 = vsel %vm2118, %v2116, %v2113
      %v2120 = vadd.f32 %v2043, 1.0
      %v2121 = vlog2.pop %v2120
      %v2122 = vmul.f32 %v2121, 0.6931472
      %v2123 = vmul.f32 -0.5, %v2043
      %v2124 = vadd.f32 %v2123, 1.0
      %v2125 = vmul.f32 %v2124, %v2043
      %v2126 = vand.u32 2147483647, %v2043
      %vm2127 = vcmp.lt.f32.partialorder %v2126, 0.0004427343
      %v2128 = vsel %vm2127, %v2125, %v2122
      %v2129 = vadd.f32 %v2045, 1.0
      %v2130 = vlog2.pop %v2129
      %v2131 = vmul.f32 %v2130, 0.6931472
      %v2132 = vmul.f32 -0.5, %v2045
      %v2133 = vadd.f32 %v2132, 1.0
      %v2134 = vmul.f32 %v2133, %v2045
      %v2135 = vand.u32 2147483647, %v2045
      %vm2136 = vcmp.lt.f32.partialorder %v2135, 0.0004427343
      %v2137 = vsel %vm2136, %v2134, %v2131
      %v2138 = vadd.f32 %v2047, 1.0
      %v2139 = vlog2.pop %v2138
      %v2140 = vmul.f32 %v2139, 0.6931472
      %v2141 = vmul.f32 -0.5, %v2047
      %v2142 = vadd.f32 %v2141, 1.0
      %v2143 = vmul.f32 %v2142, %v2047
      %v2144 = vand.u32 2147483647, %v2047
      %vm2145 = vcmp.lt.f32.partialorder %v2144, 0.0004427343
      %v2146 = vsel %vm2145, %v2143, %v2140
      %v2147 = vadd.f32 %v2049, 1.0
      %v2148 = vlog2.pop %v2147
      %v2149 = vmul.f32 %v2148, 0.6931472
      %v2150 = vmul.f32 -0.5, %v2049
      %v2151 = vadd.f32 %v2150, 1.0
      %v2152 = vmul.f32 %v2151, %v2049
      %v2153 = vand.u32 2147483647, %v2049
      %vm2154 = vcmp.lt.f32.partialorder %v2153, 0.0004427343
      %v2155 = vsel %vm2154, %v2152, %v2149
      %v2156 = vadd.f32 %v2051, 1.0
      %v2157 = vlog2.pop %v2156
      %v2158 = vmul.f32 %v2157, 0.6931472
      %v2159 = vmul.f32 -0.5, %v2051
      %v2160 = vadd.f32 %v2159, 1.0
      %v2161 = vmul.f32 %v2160, %v2051
      %v2162 = vand.u32 2147483647, %v2051
      %vm2163 = vcmp.lt.f32.partialorder %v2162, 0.0004427343
      %v2164 = vsel %vm2163, %v2161, %v2158
      %v2165 = vadd.f32 %v2053, 1.0
      %v2166 = vlog2.pop %v2165
      %v2167 = vmul.f32 %v2166, 0.6931472
      %v2168 = vmul.f32 -0.5, %v2053
      %v2169 = vadd.f32 %v2168, 1.0
      %v2170 = vmul.f32 %v2169, %v2053
      %v2171 = vand.u32 2147483647, %v2053
      %vm2172 = vcmp.lt.f32.partialorder %v2171, 0.0004427343
      %v2173 = vsel %vm2172, %v2170, %v2167
      %v2174 = vadd.f32 %v2055, 1.0
      %v2175 = vlog2.pop %v2174
      %v2176 = vmul.f32 %v2175, 0.6931472
      %v2177 = vmul.f32 -0.5, %v2055
      %v2178 = vadd.f32 %v2177, 1.0
      %v2179 = vmul.f32 %v2178, %v2055
      %v2180 = vand.u32 2147483647, %v2055
      %vm2181 = vcmp.lt.f32.partialorder %v2180, 0.0004427343
      %v2182 = vsel %vm2181, %v2179, %v2176
      %v2183 = vadd.f32 %v2057, 1.0
      %v2184 = vlog2.pop %v2183
      %v2185 = vmul.f32 %v2184, 0.6931472
      %v2186 = vmul.f32 -0.5, %v2057
      %v2187 = vadd.f32 %v2186, 1.0
      %v2188 = vmul.f32 %v2187, %v2057
      %v2189 = vand.u32 2147483647, %v2057
      %vm2190 = vcmp.lt.f32.partialorder %v2189, 0.0004427343
      %v2191 = vsel %vm2190, %v2188, %v2185
      %v2192 = vadd.f32 %v2059, 1.0
      %v2193 = vlog2.pop %v2192
      %v2194 = vmul.f32 %v2193, 0.6931472
      %v2195 = vmul.f32 -0.5, %v2059
      %v2196 = vadd.f32 %v2195, 1.0
      %v2197 = vmul.f32 %v2196, %v2059
      %v2198 = vand.u32 2147483647, %v2059
      %vm2199 = vcmp.lt.f32.partialorder %v2198, 0.0004427343
      %v2200 = vsel %vm2199, %v2197, %v2194
      %v2201 = vadd.f32 %v2061, 1.0
      %v2202 = vlog2.pop %v2201
      %v2203 = vmul.f32 %v2202, 0.6931472
      %v2204 = vmul.f32 -0.5, %v2061
      %v2205 = vadd.f32 %v2204, 1.0
      %v2206 = vmul.f32 %v2205, %v2061
      %v2207 = vand.u32 2147483647, %v2061
      %vm2208 = vcmp.lt.f32.partialorder %v2207, 0.0004427343
      %v2209 = vsel %vm2208, %v2206, %v2203
      %v2210 = vadd.f32 %v2063, 1.0
      %v2211 = vlog2.pop %v2210
      %v2212 = vmul.f32 %v2211, 0.6931472
      %v2213 = vmul.f32 -0.5, %v2063
      %v2214 = vadd.f32 %v2213, 1.0
      %v2215 = vmul.f32 %v2214, %v2063
      %v2216 = vand.u32 2147483647, %v2063
      %vm2217 = vcmp.lt.f32.partialorder %v2216, 0.0004427343
      %v2218 = vsel %vm2217, %v2215, %v2212
      %v2219 = vadd.f32 %v2065, 1.0
      %v2220 = vlog2.pop %v2219
      %v2221 = vmul.f32 %v2220, 0.6931472
      %v2222 = vmul.f32 -0.5, %v2065
      %v2223 = vadd.f32 %v2222, 1.0
      %v2224 = vmul.f32 %v2223, %v2065
      %v2225 = vand.u32 2147483647, %v2065
      %vm2226 = vcmp.lt.f32.partialorder %v2225, 0.0004427343
      %v2227 = vsel %vm2226, %v2224, %v2221
      %v2228 = vadd.f32 %v2067, 1.0
      %v2229 = vlog2.pop %v2228
      %v2230 = vmul.f32 %v2229, 0.6931472
      %v2231 = vmul.f32 -0.5, %v2067
      %v2232 = vadd.f32 %v2231, 1.0
      %v2233 = vmul.f32 %v2232, %v2067
      %v2234 = vand.u32 2147483647, %v2067
      %vm2235 = vcmp.lt.f32.partialorder %v2234, 0.0004427343
      %v2236 = vsel %vm2235, %v2233, %v2230
      %v2237 = vadd.f32 %v2069, 1.0
      %v2238 = vlog2.pop %v2237
      %v2239 = vmul.f32 %v2238, 0.6931472
      %v2240 = vmul.f32 -0.5, %v2069
      %v2241 = vadd.f32 %v2240, 1.0
      %v2242 = vmul.f32 %v2241, %v2069
      %v2243 = vand.u32 2147483647, %v2069
      %vm2244 = vcmp.lt.f32.partialorder %v2243, 0.0004427343
      %v2245 = vsel %vm2244, %v2242, %v2239
      %v2246 = vadd.f32 %v2071, 1.0
      %v2247 = vlog2.pop %v2246
      %v2248 = vmul.f32 %v2247, 0.6931472
      %v2249 = vmul.f32 -0.5, %v2071
      %v2250 = vadd.f32 %v2249, 1.0
      %v2251 = vmul.f32 %v2250, %v2071
      %v2252 = vand.u32 2147483647, %v2071
      %vm2253 = vcmp.lt.f32.partialorder %v2252, 0.0004427343
      %v2254 = vsel %vm2253, %v2251, %v2248
      %v2255 = vadd.f32 %v2073, 1.0
      %v2256 = vlog2.pop %v2255
      %v2257 = vmul.f32 %v2256, 0.6931472
      %v2258 = vmul.f32 -0.5, %v2073
      %v2259 = vadd.f32 %v2258, 1.0
      %v2260 = vmul.f32 %v2259, %v2073
      %v2261 = vand.u32 2147483647, %v2073
      %vm2262 = vcmp.lt.f32.partialorder %v2261, 0.0004427343
      %v2263 = vsel %vm2262, %v2260, %v2257
      %v2264 = vadd.f32 %v2075, 1.0
      %v2265 = vlog2.pop %v2264
      %v2266 = vmul.f32 %v2265, 0.6931472
      %v2267 = vmul.f32 -0.5, %v2075
      %v2268 = vadd.f32 %v2267, 1.0
      %v2269 = vmul.f32 %v2268, %v2075
      %v2270 = vand.u32 2147483647, %v2075
      %vm2271 = vcmp.lt.f32.partialorder %v2270, 0.0004427343
      %v2272 = vsel %vm2271, %v2269, %v2266
      %v2273 = vadd.f32 %v2077, 1.0
      %v2274 = vlog2.pop %v2273
      %v2275 = vmul.f32 %v2274, 0.6931472
      %v2276 = vmul.f32 -0.5, %v2077
      %v2277 = vadd.f32 %v2276, 1.0
      %v2278 = vmul.f32 %v2277, %v2077
      %v2279 = vand.u32 2147483647, %v2077
      %vm2280 = vcmp.lt.f32.partialorder %v2279, 0.0004427343
      %v2281 = vsel %vm2280, %v2278, %v2275
      %v2282 = vadd.f32 %v2079, 1.0
      %v2283 = vlog2.pop %v2282
      %v2284 = vmul.f32 %v2283, 0.6931472
      %v2285 = vmul.f32 -0.5, %v2079
      %v2286 = vadd.f32 %v2285, 1.0
      %v2287 = vmul.f32 %v2286, %v2079
      %v2288 = vand.u32 2147483647, %v2079
      %vm2289 = vcmp.lt.f32.partialorder %v2288, 0.0004427343
      %v2290 = vsel %vm2289, %v2287, %v2284
      %v2291 = vadd.f32 %v2081, 1.0
      %v2292 = vlog2.pop %v2291
      %v2293 = vmul.f32 %v2292, 0.6931472
      %v2294 = vmul.f32 -0.5, %v2081
      %v2295 = vadd.f32 %v2294, 1.0
      %v2296 = vmul.f32 %v2295, %v2081
      %v2297 = vand.u32 2147483647, %v2081
      %vm2298 = vcmp.lt.f32.partialorder %v2297, 0.0004427343
      %v2299 = vsel %vm2298, %v2296, %v2293
      %v2300 = vadd.f32 %v2083, 1.0
      %v2301 = vlog2.pop %v2300
      %v2302 = vmul.f32 %v2301, 0.6931472
      %v2303 = vmul.f32 -0.5, %v2083
      %v2304 = vadd.f32 %v2303, 1.0
      %v2305 = vmul.f32 %v2304, %v2083
      %v2306 = vand.u32 2147483647, %v2083
      %vm2307 = vcmp.lt.f32.partialorder %v2306, 0.0004427343
      %v2308 = vsel %vm2307, %v2305, %v2302
      %v2309 = vadd.f32 %v2085, 1.0
      %v2310 = vlog2.pop %v2309
      %v2311 = vmul.f32 %v2310, 0.6931472
      %v2312 = vmul.f32 -0.5, %v2085
      %v2313 = vadd.f32 %v2312, 1.0
      %v2314 = vmul.f32 %v2313, %v2085
      %v2315 = vand.u32 2147483647, %v2085
      %vm2316 = vcmp.lt.f32.partialorder %v2315, 0.0004427343
      %v2317 = vsel %vm2316, %v2314, %v2311
      %v2318 = vadd.f32 %v2087, 1.0
      %v2319 = vlog2.pop %v2318
      %v2320 = vmul.f32 %v2319, 0.6931472
      %v2321 = vmul.f32 -0.5, %v2087
      %v2322 = vadd.f32 %v2321, 1.0
      %v2323 = vmul.f32 %v2322, %v2087
      %v2324 = vand.u32 2147483647, %v2087
      %vm2325 = vcmp.lt.f32.partialorder %v2324, 0.0004427343
      %v2326 = vsel %vm2325, %v2323, %v2320
      %v2327 = vadd.f32 %v2089, 1.0
      %v2328 = vlog2.pop %v2327
      %v2329 = vmul.f32 %v2328, 0.6931472
      %v2330 = vmul.f32 -0.5, %v2089
      %v2331 = vadd.f32 %v2330, 1.0
      %v2332 = vmul.f32 %v2331, %v2089
      %v2333 = vand.u32 2147483647, %v2089
      %vm2334 = vcmp.lt.f32.partialorder %v2333, 0.0004427343
      %v2335 = vsel %vm2334, %v2332, %v2329
      %v2336 = vadd.f32 %v2091, 1.0
      %v2337 = vlog2.pop %v2336
      %v2338 = vmul.f32 %v2337, 0.6931472
      %v2339 = vmul.f32 -0.5, %v2091
      %v2340 = vadd.f32 %v2339, 1.0
      %v2341 = vmul.f32 %v2340, %v2091
      %v2342 = vand.u32 2147483647, %v2091
      %vm2343 = vcmp.lt.f32.partialorder %v2342, 0.0004427343
      %v2344 = vsel %vm2343, %v2341, %v2338
      %v2345 = vadd.f32 %v2093, 1.0
      %v2346 = vlog2.pop %v2345
      %v2347 = vmul.f32 %v2346, 0.6931472
      %v2348 = vmul.f32 -0.5, %v2093
      %v2349 = vadd.f32 %v2348, 1.0
      %v2350 = vmul.f32 %v2349, %v2093
      %v2351 = vand.u32 2147483647, %v2093
      %vm2352 = vcmp.lt.f32.partialorder %v2351, 0.0004427343
      %v2353 = vsel %vm2352, %v2350, %v2347
      %v2354 = vadd.f32 %v2095, 1.0
      %v2355 = vlog2.pop %v2354
      %v2356 = vmul.f32 %v2355, 0.6931472
      %v2357 = vmul.f32 -0.5, %v2095
      %v2358 = vadd.f32 %v2357, 1.0
      %v2359 = vmul.f32 %v2358, %v2095
      %v2360 = vand.u32 2147483647, %v2095
      %vm2361 = vcmp.lt.f32.partialorder %v2360, 0.0004427343
      %v2362 = vsel %vm2361, %v2359, %v2356
      %v2363 = vadd.f32 %v2097, 1.0
      %v2364 = vlog2.pop %v2363
      %v2365 = vmul.f32 %v2364, 0.6931472
      %v2366 = vmul.f32 -0.5, %v2097
      %v2367 = vadd.f32 %v2366, 1.0
      %v2368 = vmul.f32 %v2367, %v2097
      %v2369 = vand.u32 2147483647, %v2097
      %vm2370 = vcmp.lt.f32.partialorder %v2369, 0.0004427343
      %v2371 = vsel %vm2370, %v2368, %v2365
      %v2372 = vadd.f32 %v2099, 1.0
      %v2373 = vlog2.pop %v2372
      %v2374 = vmul.f32 %v2373, 0.6931472
      %v2375 = vmul.f32 -0.5, %v2099
      %v2376 = vadd.f32 %v2375, 1.0
      %v2377 = vmul.f32 %v2376, %v2099
      %v2378 = vand.u32 2147483647, %v2099
      %vm2379 = vcmp.lt.f32.partialorder %v2378, 0.0004427343
      %v2380 = vsel %vm2379, %v2377, %v2374
      %v2381 = vadd.f32 %v2101, 1.0
      %v2382 = vlog2.pop %v2381
      %v2383 = vmul.f32 %v2382, 0.6931472
      %v2384 = vmul.f32 -0.5, %v2101
      %v2385 = vadd.f32 %v2384, 1.0
      %v2386 = vmul.f32 %v2385, %v2101
      %v2387 = vand.u32 2147483647, %v2101
      %vm2388 = vcmp.lt.f32.partialorder %v2387, 0.0004427343
      %v2389 = vsel %vm2388, %v2386, %v2383
      %v2390 = vsel %vm1974, %v1653, %v2110
      %v2391 = vsel %vm1975, %v1656, %v2119
      %v2392 = vsel %vm1976, %v1661, %v2128
      %v2393 = vsel %vm1977, %v1664, %v2137
      %v2394 = vsel %vm1978, %v1669, %v2146
      %v2395 = vsel %vm1979, %v1672, %v2155
      %v2396 = vsel %vm1980, %v1677, %v2164
      %v2397 = vsel %vm1981, %v1680, %v2173
      %v2398 = vsel %vm1982, %v1685, %v2182
      %v2399 = vsel %vm1983, %v1688, %v2191
      %v2400 = vsel %vm1984, %v1693, %v2200
      %v2401 = vsel %vm1985, %v1696, %v2209
      %v2402 = vsel %vm1986, %v1701, %v2218
      %v2403 = vsel %vm1987, %v1704, %v2227
      %v2404 = vsel %vm1988, %v1709, %v2236
      %v2405 = vsel %vm1989, %v1712, %v2245
      %v2406 = vsel %vm1990, %v1717, %v2254
      %v2407 = vsel %vm1991, %v1720, %v2263
      %v2408 = vsel %vm1992, %v1725, %v2272
      %v2409 = vsel %vm1993, %v1728, %v2281
      %v2410 = vsel %vm1994, %v1733, %v2290
      %v2411 = vsel %vm1995, %v1736, %v2299
      %v2412 = vsel %vm1996, %v1741, %v2308
      %v2413 = vsel %vm1997, %v1744, %v2317
      %v2414 = vsel %vm1998, %v1749, %v2326
      %v2415 = vsel %vm1999, %v1752, %v2335
      %v2416 = vsel %vm2000, %v1757, %v2344
      %v2417 = vsel %vm2001, %v1760, %v2353
      %v2418 = vsel %vm2002, %v1765, %v2362
      %v2419 = vsel %vm2003, %v1768, %v2371
      %v2420 = vsel %vm2004, %v1773, %v2380
      %v2421 = vsel %vm2005, %v1776, %v2389
      %v2422 = vsel %vm1781, %v1911, %v2390
      %v2423 = vsel %vm1781, %v1913, %v2391
      %v2424 = vsel %vm1781, %v1915, %v2392
      %v2425 = vsel %vm1781, %v1917, %v2393
      %v2426 = vsel %vm1781, %v1919, %v2394
      %v2427 = vsel %vm1781, %v1921, %v2395
      %v2428 = vsel %vm1781, %v1923, %v2396
      %v2429 = vsel %vm1781, %v1925, %v2397
      %v2430 = vsel %vm1781, %v1927, %v2398
      %v2431 = vsel %vm1781, %v1929, %v2399
      %v2432 = vsel %vm1781, %v1931, %v2400
      %v2433 = vsel %vm1781, %v1933, %v2401
      %v2434 = vsel %vm1781, %v1935, %v2402
      %v2435 = vsel %vm1781, %v1937, %v2403
      %v2436 = vsel %vm1781, %v1939, %v2404
      %v2437 = vsel %vm1781, %v1941, %v2405
      %v2438 = vsel %vm1781, %v1943, %v2406
      %v2439 = vsel %vm1781, %v1945, %v2407
      %v2440 = vsel %vm1781, %v1947, %v2408
      %v2441 = vsel %vm1781, %v1949, %v2409
      %v2442 = vsel %vm1781, %v1951, %v2410
      %v2443 = vsel %vm1781, %v1953, %v2411
      %v2444 = vsel %vm1781, %v1955, %v2412
      %v2445 = vsel %vm1781, %v1957, %v2413
      %v2446 = vsel %vm1781, %v1959, %v2414
      %v2447 = vsel %vm1781, %v1961, %v2415
      %v2448 = vsel %vm1781, %v1963, %v2416
      %v2449 = vsel %vm1781, %v1965, %v2417
      %v2450 = vsel %vm1781, %v1967, %v2418
      %v2451 = vsel %vm1781, %v1969, %v2419
      %v2452 = vsel %vm1781, %v1971, %v2420
      %v2453 = vsel %vm1781, %v1973, %v2421
      %vm2454 = vcmask 31744
      %2455 = vst.msk [vmem:[%s356] sm:$0xff] %vm2454, %v2422
      %2456 = vst.msk [vmem:[%s356 + $0x8] sm:$0xff] %vm2454, %v2423
      %2457 = vst.msk [vmem:[%s356 + $0x10] sm:$0xff] %vm2454, %v2424
      %2458 = vst.msk [vmem:[%s356 + $0x18] sm:$0xff] %vm2454, %v2425
      %2459 = vst.msk [vmem:[%s356 + $0x20] sm:$0xff] %vm2454, %v2426
      %2460 = vst.msk [vmem:[%s356 + $0x28] sm:$0xff] %vm2454, %v2427
      %2461 = vst.msk [vmem:[%s356 + $0x30] sm:$0xff] %vm2454, %v2428
      %2462 = vst.msk [vmem:[%s356 + $0x38] sm:$0xff] %vm2454, %v2429
      %2463 = vst.msk [vmem:[%s356 + $0x40] sm:$0xff] %vm2454, %v2430
      %2464 = vst.msk [vmem:[%s356 + $0x48] sm:$0xff] %vm2454, %v2431
      %2465 = vst.msk [vmem:[%s356 + $0x50] sm:$0xff] %vm2454, %v2432
      %2466 = vst.msk [vmem:[%s356 + $0x58] sm:$0xff] %vm2454, %v2433
      %2467 = vst.msk [vmem:[%s356 + $0x60] sm:$0xff] %vm2454, %v2434
      %2468 = vst.msk [vmem:[%s356 + $0x68] sm:$0xff] %vm2454, %v2435
      %2469 = vst.msk [vmem:[%s356 + $0x70] sm:$0xff] %vm2454, %v2436
      %2470 = vst.msk [vmem:[%s356 + $0x78] sm:$0xff] %vm2454, %v2437
      %2471 = vst.msk [vmem:[%s356 + $0x80] sm:$0xff] %vm2454, %v2438
      %2472 = vst.msk [vmem:[%s356 + $0x88] sm:$0xff] %vm2454, %v2439
      %2473 = vst.msk [vmem:[%s356 + $0x90] sm:$0xff] %vm2454, %v2440
      %2474 = vst.msk [vmem:[%s356 + $0x98] sm:$0xff] %vm2454, %v2441
      %2475 = vst.msk [vmem:[%s356 + $0xa0] sm:$0xff] %vm2454, %v2442
      %2476 = vst.msk [vmem:[%s356 + $0xa8] sm:$0xff] %vm2454, %v2443
      %2477 = vst.msk [vmem:[%s356 + $0xb0] sm:$0xff] %vm2454, %v2444
      %2478 = vst.msk [vmem:[%s356 + $0xb8] sm:$0xff] %vm2454, %v2445
      %2479 = vst.msk [vmem:[%s356 + $0xc0] sm:$0xff] %vm2454, %v2446
      %2480 = vst.msk [vmem:[%s356 + $0xc8] sm:$0xff] %vm2454, %v2447
      %2481 = vst.msk [vmem:[%s356 + $0xd0] sm:$0xff] %vm2454, %v2448
      %2482 = vst.msk [vmem:[%s356 + $0xd8] sm:$0xff] %vm2454, %v2449
      %2483 = vst.msk [vmem:[%s356 + $0xe0] sm:$0xff] %vm2454, %v2450
      %2484 = vst.msk [vmem:[%s356 + $0xe8] sm:$0xff] %vm2454, %v2451
      %2485 = vst.msk [vmem:[%s356 + $0xf0] sm:$0xff] %vm2454, %v2452
      %2486 = vst.msk [vmem:[%s356 + $0xf8] sm:$0xff] %vm2454, %v2453
      %s2487 = smul.u32 32, %s20
      %p2488 = scmp.lt.s32.totalorder %s2487, 127
      %s2489 = scalar_select %p2488, %s2487, 127
      %s2490 = smul.addr %s2489, 8
      %s2491 = scalar_lea.vmem %s9, %s2490
      // Predicated region
      $region57: #{mvsnerf_pallas.1} parent=55 // pred_check
        %p2492 = pneg %p237
      $region58: #{mvsnerf_pallas.1} parent=55 // pred_check_branch
        %2494 = sbr.rel (%p2492) target = $region60
      $region59: #{mvsnerf_pallas.1} parent=55 // pred_region
        %s2495 = smul.u32 32, %s20
      $region60: #{mvsnerf_pallas.1} parent=55 // pred_fallthru
        _
    $region56: #{mvsnerf_pallas.1} parent=5 // pred_fallthru
      _
    %p2496 = scmp.le.s32.totalorder 2, %s15
    // Predicated region
    $region61: #{mvsnerf_pallas.1} parent=5 // pred_check
      %p2497 = pneg %p2496
    $region62: #{mvsnerf_pallas.1} parent=5 // pred_check_branch
      %2499 = sbr.rel (%p2497) target = $region64
    $region63: #{mvsnerf_pallas.1} parent=5 // pred_region
      %s2500 = ssub.s32 %s15, 2
      // Predicated region
      $region65: #{mvsnerf_pallas.1} parent=63 // pred_check
        %p2501 = pneg %p243
      $region66: #{mvsnerf_pallas.1} parent=63 // pred_check_branch
        %2503 = sbr.rel (%p2501) target = $region68
      $region67: #{mvsnerf_pallas.1} parent=63 // pred_region
        %s2504 = smul.u32 32, %s21
        %p2505 = scmp.lt.s32.totalorder %s2504, 127
        %s2506 = scalar_select %p2505, %s2504, 127
        %s2507 = smul.addr %s2506, 8
        %s2508 = scalar_lea.vmem %s9, %s2507
      $region68: #{mvsnerf_pallas.1} parent=63 // pred_fallthru
        _
    $region64: #{mvsnerf_pallas.1} parent=5 // pred_fallthru
      _
  $region6: #{mvsnerf_pallas.1} parent=0 // loop_footer
    %s19 = sadd.s32 1, %s15
  $region7: #{mvsnerf_pallas.1} parent=0 // loop_footer_branch
    %14 = sbr.rel target = $region3
  $region8: #{mvsnerf_pallas.1} parent=0 // loop_exit
    _

</llo_original>
